<compile_context>
chip_gen: v7x
topology: tpu7x:2x2x1
jax: 0.10.0
libtpu: 0.0.40
codegen_flags: <defaults>
</compile_context>

<pallas_src>
import functools
import math

import numpy as np

import jax
import jax.numpy as jnp
from jax.experimental import pallas as pl
from jax.experimental.pallas import tpu as pltpu

# ----------------------------- MiT-B3 config --------------------------------
EMBED_DIMS = (64, 128, 320, 512)
NUM_HEADS = (1, 2, 5, 8)
DEPTHS = (3, 4, 18, 3)
SR_RATIOS = (8, 4, 2, 1)
MLP_RATIO = 4
DECODER_DIM = 256


def _round_up(x, m):
    return (x + m - 1) // m * m


def _tile_caps():
    """Per-generation GEMM tile caps: bigger tiles on 128-MiB-VMEM parts."""
    try:
        vmem = pltpu.get_tpu_info().vmem_capacity_bytes
    except Exception:
        vmem = 64 << 20
    if vmem >= (100 << 20):       # v5e / v6e: 128 MiB physical VMEM
        return 512, 1024
    return 256, 512               # v7x: 64 MiB physical VMEM


_TM_CAP, _TN_CAP = _tile_caps()


def _row_tile(m, cap=None):
    """Padded row count (multiple of 16 for packed bf16 sublanes) + row tile."""
    cap = _TM_CAP if cap is None else cap
    mp = _round_up(m, 16)
    t = math.gcd(mp, cap)
    if t < 64 and mp > 256:
        mp = _round_up(m, 256)
        t = math.gcd(mp, cap)
    return mp, t


def _col_tile(n, cap=None):
    """Lane tile: a multiple of 128 dividing n, else the full (ragged) dim."""
    cap = _TN_CAP if cap is None else cap
    return math.gcd(n, cap) if n % 128 == 0 else n


def _vmem_limit(*block_nbytes):
    """Explicit scoped-VMEM limit from block footprints (double-buffered)."""
    need = 2 * sum(int(b) for b in block_nbytes) + (1 << 20)
    return int(min(64 << 20, max(32 << 20, need)))


_GELU_C = 0.7978845608028654  # sqrt(2/pi)


def _gelu_f32(x):
    """tanh-form GELU: a single EUP tanh per element (cheap on all gens)."""
    return 0.5 * x * (1.0 + jnp.tanh(_GELU_C * (x + 0.044715 * x * x * x)))


# ============================= Pallas kernels ================================

def _mm_epilogue(y, bias_ref, r_ref, o_ref, act):
    y = y + bias_ref[...].astype(jnp.float32)
    if act == "relu":
        y = jnp.maximum(y, 0.0)
    elif act == "gelu":
        y = _gelu_f32(y)
    if r_ref is not None:
        y = y + r_ref[...].astype(jnp.float32)
    o_ref[...] = y.astype(o_ref.dtype)


def _matmul_kernel_1k(a_ref, b_ref, bias_ref, *rest, act, has_res):
    """Fast path: the whole K dimension fits one block (no accumulator)."""
    if has_res:
        r_ref, o_ref = rest
    else:
        (o_ref,) = rest
        r_ref = None
    y = jnp.dot(a_ref[...], b_ref[...], preferred_element_type=jnp.float32)
    _mm_epilogue(y, bias_ref, r_ref, o_ref, act)


def _matmul_kernel(a_ref, b_ref, bias_ref, *rest, act, has_res):
    if has_res:
        r_ref, o_ref, acc_ref = rest
    else:
        o_ref, acc_ref = rest
        r_ref = None
    k = pl.program_id(2)

    @pl.when(k == 0)
    def _():
        acc_ref[...] = jnp.zeros_like(acc_ref)

    acc_ref[...] += jnp.dot(a_ref[...], b_ref[...],
                            preferred_element_type=jnp.float32)

    @pl.when(k == pl.num_programs(2) - 1)
    def _():
        _mm_epilogue(acc_ref[...], bias_ref, r_ref, o_ref, act)


def matmul(a, b, bias=None, act=None, residual=None, out_dtype=jnp.bfloat16):
    """(M,K) @ (K,N) + bias [+ act] [+ residual]. bf16 MXU, f32 accumulate."""
    M, K = a.shape
    K2, N = b.shape
    assert K == K2
    if a.dtype != jnp.bfloat16:
        a = a.astype(jnp.bfloat16)
    if b.dtype != jnp.bfloat16:
        b = b.astype(jnp.bfloat16)
    Mp, tm = _row_tile(M)
    if Mp != M:
        a = jnp.pad(a, ((0, Mp - M), (0, 0)))
    tk = _col_tile(K)
    tn = _col_tile(N)
    nk = K // tk
    if bias is None:
        bias = jnp.zeros((N,), jnp.float32)
    bias = bias.astype(jnp.float32).reshape(1, N)

    has_res = residual is not None
    args = [a, b, bias]
    block_bytes = [tm * tk * 2, tk * tn * 2, tn * 4,
                   tm * tn * jnp.dtype(out_dtype).itemsize]
    if nk > 1:
        in_specs = [
            pl.BlockSpec((tm, tk), lambda i, j, k: (i, k)),
            pl.BlockSpec((tk, tn), lambda i, j, k: (k, j)),
            pl.BlockSpec((1, tn), lambda i, j, k: (0, j)),
        ]
        out_spec = pl.BlockSpec((tm, tn), lambda i, j, k: (i, j))
        res_spec = pl.BlockSpec((tm, tn), lambda i, j, k: (i, j))
        grid = (Mp // tm, N // tn, nk)
        sems = ("parallel", "parallel", "arbitrary")
        scratch = [pltpu.VMEM((tm, tn), jnp.float32)]
        block_bytes.append(tm * tn * 4)
        kernel = functools.partial(_matmul_kernel, act=act, has_res=has_res)
    else:
        in_specs = [
            pl.BlockSpec((tm, tk), lambda i, j: (i, 0)),
            pl.BlockSpec((tk, tn), lambda i, j: (0, j)),
            pl.BlockSpec((1, tn), lambda i, j: (0, j)),
        ]
        out_spec = pl.BlockSpec((tm, tn), lambda i, j: (i, j))
        res_spec = pl.BlockSpec((tm, tn), lambda i, j: (i, j))
        grid = (Mp // tm, N // tn)
        sems = ("parallel", "parallel")
        scratch = []
        kernel = functools.partial(_matmul_kernel_1k, act=act, has_res=has_res)

    if has_res:
        r = residual
        if r.dtype != jnp.bfloat16:
            r = r.astype(jnp.bfloat16)
        if Mp != M:
            r = jnp.pad(r, ((0, Mp - M), (0, 0)))
        args.append(r)
        in_specs.append(res_spec)
        block_bytes.append(tm * tn * 2)

    out = pl.pallas_call(
        kernel,
        out_shape=jax.ShapeDtypeStruct((Mp, N), out_dtype),
        grid=grid,
        in_specs=in_specs,
        out_specs=out_spec,
        scratch_shapes=scratch,
        compiler_params=pltpu.CompilerParams(
            dimension_semantics=sems,
            vmem_limit_bytes=_vmem_limit(*block_bytes)),
    )(*args)
    return out[:M] if Mp != M else out


def _ln_kernel(x_ref, g_ref, b_ref, o_ref, *, eps):
    x = x_ref[...].astype(jnp.float32)
    mu = jnp.mean(x, axis=-1, keepdims=True)
    xc = x - mu
    var = jnp.mean(xc * xc, axis=-1, keepdims=True)
    y = xc * jax.lax.rsqrt(var + eps)
    o_ref[...] = (y * g_ref[...] + b_ref[...]).astype(o_ref.dtype)


def layer_norm(x, g, b, eps, out_dtype=jnp.bfloat16):
    """LayerNorm over the last dim of a (rows, C) matrix."""
    M, C = x.shape
    Mp, tr = _row_tile(M)
    if Mp != M:
        x = jnp.pad(x, ((0, Mp - M), (0, 0)))
    bpe = jnp.dtype(x.dtype).itemsize
    out = pl.pallas_call(
        functools.partial(_ln_kernel, eps=eps),
        out_shape=jax.ShapeDtypeStruct((Mp, C), out_dtype),
        grid=(Mp // tr,),
        in_specs=[
            pl.BlockSpec((tr, C), lambda i: (i, 0)),
            pl.BlockSpec((1, C), lambda i: (0, 0)),
            pl.BlockSpec((1, C), lambda i: (0, 0)),
        ],
        out_specs=pl.BlockSpec((tr, C), lambda i: (i, 0)),
        compiler_params=pltpu.CompilerParams(
            dimension_semantics=("parallel",),
            vmem_limit_bytes=_vmem_limit(tr * C * bpe, 2 * C * 4, tr * C * 2)),
    )(x, g.astype(jnp.float32).reshape(1, C), b.astype(jnp.float32).reshape(1, C))
    return out[:M] if Mp != M else out


def _attn_kernel(q_ref, kv_ref, o_ref, *, scale, nheads, dh):
    """Per (batch, q-tile) block: loop heads on static lane slices.

    q_ref: (tm, nheads*dh), kv_ref: (Nk, 2*nheads*dh) [K heads | V heads],
    o_ref: (tm, nheads*dh) -- one lane-dense output block per grid step.
    """
    dim = nheads * dh
    for h in range(nheads):
        qh = q_ref[:, h * dh:(h + 1) * dh]                    # (tm, dh) bf16
        kh = kv_ref[:, h * dh:(h + 1) * dh]                   # (Nk, dh) bf16
        vh = kv_ref[:, dim + h * dh:dim + (h + 1) * dh]       # (Nk, dh) bf16
        s = jax.lax.dot_general(qh, kh, (((1,), (1,)), ((), ())),
                                preferred_element_type=jnp.float32) * scale
        m = jnp.max(s, axis=-1, keepdims=True)
        e = jnp.exp(s - m)
        denom = jnp.sum(e, axis=-1, keepdims=True)
        p = (e * pl.reciprocal(denom, approx=True)).astype(jnp.bfloat16)
        o_ref[:, h * dh:(h + 1) * dh] = jnp.dot(
            p, vh, preferred_element_type=jnp.float32).astype(o_ref.dtype)


def fused_attention(q, kv, *, nheads, scale):
    """softmax(q k^T * scale) v, fused, all heads per kernel invocation.

    q: (B, N, dim) bf16; kv: (B, Nk, 2*dim) bf16 (K then V, head-major along
    the last axis, exactly the layout the kv Linear produces). -> (B, N, dim).
    """
    B, N, dim = q.shape
    Nk = kv.shape[1]
    dh = dim // nheads
    Np, tm = _row_tile(N, cap=128)      # cap q tile at 128: vreg pressure
    if Np != N:
        q = jnp.pad(q, ((0, 0), (0, Np - N), (0, 0)))
    block_bytes = [tm * dim * 2, Nk * 2 * dim * 2, tm * dim * 2]
    out = pl.pallas_call(
        functools.partial(_attn_kernel, scale=scale, nheads=nheads, dh=dh),
        out_shape=jax.ShapeDtypeStruct((B, Np, dim), jnp.bfloat16),
        grid=(B, Np // tm),
        in_specs=[
            pl.BlockSpec((None, tm, dim), lambda b, i: (b, i, 0)),
            pl.BlockSpec((None, Nk, 2 * dim), lambda b, i: (b, 0, 0)),
        ],
        out_specs=pl.BlockSpec((None, tm, dim), lambda b, i: (b, i, 0)),
        compiler_params=pltpu.CompilerParams(
            dimension_semantics=("parallel", "parallel"),
            vmem_limit_bytes=_vmem_limit(*block_bytes)),
    )(q, kv)
    return out[:, :N] if Np != N else out


def _dwconv_gelu_kernel(x_ref, w_ref, b_ref, o_ref):
    H, W, C = o_ref.shape
    w = w_ref[...].astype(jnp.float32)               # (9, C)
    acc = jnp.zeros((H, W, C), jnp.float32) + \
        b_ref[...].astype(jnp.float32).reshape(1, 1, C)
    t = 0
    for dy in range(3):                              # static unroll, 9 taps
        for dx in range(3):
            tap = x_ref[dy:dy + H, dx:dx + W, :].astype(jnp.float32)
            acc = acc + tap * w[t:t + 1, :].reshape(1, 1, C)
            t += 1
    o_ref[...] = _gelu_f32(acc).astype(o_ref.dtype)


def dwconv3x3_gelu(x, w, b):
    """Depthwise 3x3 (stride 1, pad 1) + GELU.  x: (B,H,W,C) NHWC, w: (C,1,3,3)."""
    B, H, W, C = x.shape
    xp = jnp.pad(x.astype(jnp.bfloat16), ((0, 0), (1, 1), (1, 1), (0, 0)))
    w9 = jnp.transpose(w[:, 0, :, :], (1, 2, 0)).reshape(9, C).astype(jnp.float32)
    tc = _col_tile(C)
    block_bytes = [(H + 2) * (W + 2) * tc * 2, 9 * tc * 4, tc * 4, H * W * tc * 2]
    # TODO(synk): at real resolutions (e.g. 512^2 inputs) this should row-tile
    # H with a 1-row halo (element-indexed blocks or manual DMA) and handle the
    # 1-pixel pad inside the kernel instead of the jnp.pad HBM round trip.
    out = pl.pallas_call(
        _dwconv_gelu_kernel,
        out_shape=jax.ShapeDtypeStruct((B, H, W, C), jnp.bfloat16),
        grid=(B, C // tc),
        in_specs=[
            pl.BlockSpec((None, H + 2, W + 2, tc), lambda b, c: (b, 0, 0, c)),
            pl.BlockSpec((9, tc), lambda b, c: (0, c)),
            pl.BlockSpec((1, tc), lambda b, c: (0, c)),
        ],
        out_specs=pl.BlockSpec((None, H, W, tc), lambda b, c: (b, 0, 0, c)),
        compiler_params=pltpu.CompilerParams(
            dimension_semantics=("parallel", "parallel"),
            vmem_limit_bytes=_vmem_limit(*block_bytes)),
    )(xp, w9, b.astype(jnp.float32).reshape(1, C))
    return out.reshape(B * H * W, C)


def _resize_kernel(a_ref, x_ref, o_ref):
    o_ref[...] = jnp.dot(a_ref[...], x_ref[...],
                         preferred_element_type=jnp.float32).astype(o_ref.dtype)


def resize_matmul(A, x, out_dtype):
    """out[g] = A @ x[g];  A: (M,K) interpolation matrix (bf16 on the MXU)."""
    G, K, N = x.shape
    M = A.shape[0]
    tn = _col_tile(N)
    if x.dtype != jnp.bfloat16:
        x = x.astype(jnp.bfloat16)
    block_bytes = [M * K * 2, K * tn * 2, M * tn * jnp.dtype(out_dtype).itemsize]
    return pl.pallas_call(
        _resize_kernel,
        out_shape=jax.ShapeDtypeStruct((G, M, N), out_dtype),
        grid=(G, N // tn),
        in_specs=[
            pl.BlockSpec((M, K), lambda g, j: (0, 0)),
            pl.BlockSpec((None, K, tn), lambda g, j: (g, 0, j)),
        ],
        out_specs=pl.BlockSpec((None, M, tn), lambda g, j: (g, 0, j)),
        compiler_params=pltpu.CompilerParams(
            dimension_semantics=("parallel", "parallel"),
            vmem_limit_bytes=_vmem_limit(*block_bytes)),
    )(A.astype(jnp.bfloat16), x)


# ============================ JAX glue (im2col etc.) =========================

def conv2d_im2col(x, w, b, stride, pad, out_dtype=jnp.bfloat16):
    """Dense conv via im2col + Pallas matmul. x NHWC (bf16), w OIHW (PyTorch)."""
    # TODO(synk): for real-resolution inputs the stage-1 7x7/stride-4 patch
    # embed should gather patches via the Pallas grid instead of materialising
    # the ~12x im2col tensor in HBM (fine at the small test size).
    B, H, W, Cin = x.shape
    Cout, _, kh, kw = w.shape
    Ho = (H + 2 * pad - kh) // stride + 1
    Wo = (W + 2 * pad - kw) // stride + 1
    xp = jnp.pad(x, ((0, 0), (pad, pad), (pad, pad), (0, 0))) if pad else x
    cols = [xp[:, dy:dy + Ho * stride:stride, dx:dx + Wo * stride:stride, :]
            for dy in range(kh) for dx in range(kw)]
    patches = jnp.stack(cols, axis=3).reshape(B * Ho * Wo, kh * kw * Cin)
    w2 = jnp.transpose(w, (2, 3, 1, 0)).reshape(kh * kw * Cin, Cout)
    out = matmul(patches, w2, b, out_dtype=out_dtype)
    return out.reshape(B, Ho, Wo, Cout)


def _interp_matrix(out_size, in_size):
    """PyTorch bilinear (align_corners=False) interpolation matrix (out,in)."""
    A = np.zeros((out_size, in_size), np.float32)
    if in_size == 1:
        A[:, 0] = 1.0
        return jnp.asarray(A)
    scale = in_size / out_size
    for i in range(out_size):
        src = max((i + 0.5) * scale - 0.5, 0.0)
        i0 = min(int(np.floor(src)), in_size - 1)
        frac = src - i0
        i1 = min(i0 + 1, in_size - 1)
        A[i, i0] += 1.0 - frac
        A[i, i1] += frac
    return jnp.asarray(A)


def bilinear_resize_nhwc(x, Ho, Wo, out_dtype=jnp.bfloat16):
    """Separable bilinear resize: two batched left-matmuls, no transposes."""
    B, H, W, C = x.shape
    y = resize_matmul(_interp_matrix(Wo, W), x.reshape(B * H, W, C), jnp.bfloat16)
    y = resize_matmul(_interp_matrix(Ho, H), y.reshape(B, H, Wo * C), out_dtype)
    return y.reshape(B, Ho, Wo, C)


# ============================== parameters ===================================

class _KeyGen:
    def __init__(self, key):
        self._key = key

    def normal(self, shape, std):
        self._key, sub = jax.random.split(self._key)
        return std * jax.random.normal(sub, shape, dtype=jnp.float32)


def init_params(key, in_chans, num_classes):
    rng = _KeyGen(key)

    def lin(cin, cout):  # stored (in, out), bf16, for y = x @ W + b
        return {"w": rng.normal((cin, cout), 0.02).astype(jnp.bfloat16),
                "b": jnp.zeros((cout,), jnp.float32)}

    def ln(c):
        return {"g": jnp.ones((c,), jnp.float32),
                "b": jnp.zeros((c,), jnp.float32)}

    def conv(cout, cin, k):  # PyTorch OIHW layout, kaiming fan_out init, bf16
        std = (2.0 / (k * k * cout)) ** 0.5
        return {"w": rng.normal((cout, cin, k, k), std).astype(jnp.bfloat16),
                "b": jnp.zeros((cout,), jnp.float32)}

    stages = []
    prev = in_chans
    for s in range(4):
        d = EMBED_DIMS[s]
        k = 7 if s == 0 else 3
        st = {"patch_conv": conv(d, prev, k), "patch_ln": ln(d),
              "blocks": [], "norm": ln(d)}
        for _ in range(DEPTHS[s]):
            blk = {"norm1": ln(d), "q": lin(d, d), "kv": lin(d, 2 * d),
                   "proj": lin(d, d), "norm2": ln(d),
                   "fc1": lin(d, MLP_RATIO * d),
                   "dw": {"w": rng.normal((MLP_RATIO * d, 1, 3, 3),
                                          (2.0 / 9.0) ** 0.5),
                          "b": jnp.zeros((MLP_RATIO * d,), jnp.float32)},
                   "fc2": lin(MLP_RATIO * d, d)}
            if SR_RATIOS[s] > 1:
                blk["sr"] = conv(d, d, SR_RATIOS[s])
                blk["sr_ln"] = ln(d)
            st["blocks"].append(blk)
        stages.append(st)
        prev = d

    dec = {"lin": [lin(EMBED_DIMS[i], DECODER_DIM) for i in range(4)],
           "fuse_w": rng.normal((DECODER_DIM, 4 * DECODER_DIM, 1, 1),
                                (2.0 / DECODER_DIM) ** 0.5),
           "bn_g": jnp.ones((DECODER_DIM,), jnp.float32),
           "bn_b": jnp.zeros((DECODER_DIM,), jnp.float32),
           "bn_mean": jnp.zeros((DECODER_DIM,), jnp.float32),
           "bn_var": jnp.ones((DECODER_DIM,), jnp.float32),
           "pred_w": rng.normal((num_classes, DECODER_DIM, 1, 1),
                                (2.0 / num_classes) ** 0.5),
           "pred_b": jnp.zeros((num_classes,), jnp.float32)}
    return {"stages": stages, "decoder": dec}


# ============================== model forward ================================

@functools.partial(jax.jit, static_argnames=("H", "W", "nheads", "sr"))
def transformer_block(tok, p, *, H, W, nheads, sr):
    Ntok, dim = tok.shape
    N = H * W
    B = Ntok // N
    dh = dim // nheads

    # ---- efficient self-attention (fused scores / softmax / context) ----
    xn = layer_norm(tok, p["norm1"]["g"], p["norm1"]["b"], eps=1e-6)
    q = matmul(xn, p["q"]["w"], p["q"]["b"], out_dtype=jnp.bfloat16)
    if sr > 1:
        xr = conv2d_im2col(xn.reshape(B, H, W, dim), p["sr"]["w"], p["sr"]["b"],
                           stride=sr, pad=0, out_dtype=jnp.bfloat16)
        Hr, Wr = xr.shape[1], xr.shape[2]
        kv_in = layer_norm(xr.reshape(B * Hr * Wr, dim),
                           p["sr_ln"]["g"], p["sr_ln"]["b"], eps=1e-5)
        Nk = Hr * Wr
    else:
        kv_in, Nk = xn, N
    kv = matmul(kv_in, p["kv"]["w"], p["kv"]["b"], out_dtype=jnp.bfloat16)
    ctx = fused_attention(q.reshape(B, N, dim), kv.reshape(B, Nk, 2 * dim),
                          nheads=nheads, scale=float(dh) ** -0.5)
    tok = matmul(ctx.reshape(B * N, dim), p["proj"]["w"], p["proj"]["b"],
                 residual=tok, out_dtype=jnp.bfloat16)
    # DropPath / attention dropout are identity at inference.

    # ---- Mix-FFN: fc1 -> dwconv3x3 + GELU (fused) -> fc2 (+ residual) ----
    xn = layer_norm(tok, p["norm2"]["g"], p["norm2"]["b"], eps=1e-6)
    h = matmul(xn, p["fc1"]["w"], p["fc1"]["b"], out_dtype=jnp.bfloat16)
    h = dwconv3x3_gelu(h.reshape(B, H, W, h.shape[-1]),
                       p["dw"]["w"], p["dw"]["b"])
    tok = matmul(h, p["fc2"]["w"], p["fc2"]["b"], residual=tok,
                 out_dtype=jnp.bfloat16)
    return tok


@functools.partial(jax.jit, static_argnames=("stride", "pad"))
def patch_embed(x, cw, cb, lg, lb, *, stride, pad):
    y = conv2d_im2col(x, cw, cb, stride=stride, pad=pad, out_dtype=jnp.bfloat16)
    B, Ho, Wo, C = y.shape
    return layer_norm(y.reshape(B * Ho * Wo, C), lg, lb, eps=1e-5,
                      out_dtype=jnp.bfloat16)


@jax.jit
def stage_norm(tok, g, b):
    return layer_norm(tok, g, b, eps=1e-6, out_dtype=jnp.bfloat16)


def decoder_forward(feats, dp):
    B, H1, W1, _ = feats[0].shape
    ups = []
    for i in (3, 2, 1, 0):                       # concat order: c4, c3, c2, c1
        f = feats[i]
        _, Hi, Wi, Ci = f.shape
        t = matmul(f.reshape(B * Hi * Wi, Ci), dp["lin"][i]["w"],
                   dp["lin"][i]["b"], out_dtype=jnp.bfloat16)
        fm = t.reshape(B, Hi, Wi, DECODER_DIM)
        if (Hi, Wi) != (H1, W1):
            fm = bilinear_resize_nhwc(fm, H1, W1, out_dtype=jnp.bfloat16)
        ups.append(fm)
    cat = jnp.concatenate(ups, axis=-1)          # (B, H1, W1, 4*256)

    # 1x1 fuse conv (no bias) with eval-mode BatchNorm folded in, ReLU fused.
    scale = dp["bn_g"] * jax.lax.rsqrt(dp["bn_var"] + 1e-5)
    w_fuse = jnp.transpose(dp["fuse_w"][:, :, 0, 0], (1, 0)) * scale[None, :]
    b_fuse = dp["bn_b"] - dp["bn_mean"] * scale
    fused = matmul(cat.reshape(B * H1 * W1, 4 * DECODER_DIM), w_fuse, b_fuse,
                   act="relu", out_dtype=jnp.bfloat16)
    # Dropout2d in the decode head is identity at inference.
    w_pred = jnp.transpose(dp["pred_w"][:, :, 0, 0], (1, 0))
    logits = matmul(fused, w_pred, dp["pred_b"], out_dtype=jnp.float32)
    return logits.reshape(B, H1, W1, -1)


@functools.partial(jax.jit, static_argnames=("Himg", "Wimg"))
def decode_and_upsample(feats, dp, *, Himg, Wimg):
    logits = decoder_forward(feats, dp)                            # NHWC, H/4
    up = bilinear_resize_nhwc(logits, Himg, Wimg, out_dtype=jnp.float32)
    return jnp.transpose(up, (0, 3, 1, 2))                         # NCHW


def segformer_forward(x_nchw, params):
    """Full SegFormer MiT-B3 forward. Input/output NCHW like PyTorch."""
    B, _, Himg, Wimg = x_nchw.shape
    x = jnp.transpose(x_nchw, (0, 2, 3, 1)).astype(jnp.bfloat16)   # NHWC
    strides, pads = (4, 2, 2, 2), (3, 1, 1, 1)
    feats = []
    H, W = Himg, Wimg
    for s in range(4):
        st = params["stages"][s]
        kh = st["patch_conv"]["w"].shape[2]
        Ho = (H + 2 * pads[s] - kh) // strides[s] + 1
        Wo = (W + 2 * pads[s] - kh) // strides[s] + 1
        tok = patch_embed(x, st["patch_conv"]["w"], st["patch_conv"]["b"],
                          st["patch_ln"]["g"], st["patch_ln"]["b"],
                          stride=strides[s], pad=pads[s])
        for blk in st["blocks"]:
            tok = transformer_block(tok, blk, H=Ho, W=Wo,
                                    nheads=NUM_HEADS[s], sr=SR_RATIOS[s])
        tok = stage_norm(tok, st["norm"]["g"], st["norm"]["b"])
        x = tok.reshape(B, Ho, Wo, EMBED_DIMS[s])
        feats.append(x)
        H, W = Ho, Wo
    return decode_and_upsample(tuple(feats), params["decoder"],
                               Himg=Himg, Wimg=Wimg)


# ================================== main =====================================

if __name__ == "__main__":
    in_channels, num_classes = 3, 4
    key = jax.random.PRNGKey(0)
    pkey, xkey = jax.random.split(key)
    params = init_params(pkey, in_channels, num_classes)

    # Small input consistent with the module: batch=2, NCHW, 64x64 spatial
    # (divisible by 32 so every stage stride / sr-ratio reduction is valid).
    x = jax.random.normal(xkey, (2, in_channels, 64, 64), dtype=jnp.float32)

    out = segformer_forward(x, params)
    out = jax.block_until_ready(out)
    assert out.shape == (2, num_classes, 64, 64), out.shape
    assert bool(jnp.all(jnp.isfinite(out)))
    print("KERNEL_OK")
</pallas_src>

<mosaic_0001>
module attributes {stable_mosaic.version = 11 : i64} {
  func.func @_ln_kernel(%arg0: i32, %arg1: memref<256x64xbf16, #tpu.memory_space<vmem>>, %arg2: memref<1x64xf32, #tpu.memory_space<vmem>>, %arg3: memref<1x64xf32, #tpu.memory_space<vmem>>, %arg4: memref<256x64xbf16, #tpu.memory_space<vmem>>) attributes {dimension_semantics = [#tpu.dimension_semantics<parallel>], iteration_bounds = array<i64: 2>, scalar_prefetch = 0 : i64, scratch_operands = 0 : i64, tpu.core_type = #tpu.core_type<tc>, window_params = [{transform_indices = @transform_0, window_bounds = array<i64: 256, 64>}, {pipeline_mode = #tpu.pipeline_mode<synchronous>, transform_indices = @transform_1, window_bounds = array<i64: 1, 64>}, {pipeline_mode = #tpu.pipeline_mode<synchronous>, transform_indices = @transform_2, window_bounds = array<i64: 1, 64>}, {transform_indices = @transform_3, window_bounds = array<i64: 256, 64>}]} {
    %c0 = arith.constant 0 : index
    %c0_0 = arith.constant 0 : index
    %0 = vector.load %arg1[%c0, %c0_0] : memref<256x64xbf16, #tpu.memory_space<vmem>>, vector<256x64xbf16>
    %1 = arith.extf %0 : vector<256x64xbf16> to vector<256x64xf32>
    %cst = arith.constant dense<0.000000e+00> : vector<256xf32>
    %2 = vector.multi_reduction <add>, %1, %cst [1] : vector<256x64xf32> to vector<256xf32>
    %3 = vector.shape_cast %2 : vector<256xf32> to vector<256x1xf32>
    %cst_1 = arith.constant 6.400000e+01 : f32
    %4 = vector.broadcast %cst_1 : f32 to vector<256x1xf32>
    %5 = arith.divf %3, %4 : vector<256x1xf32>
    %6 = vector.broadcast %5 : vector<256x1xf32> to vector<256x64xf32>
    %7 = arith.subf %1, %6 : vector<256x64xf32>
    %8 = arith.mulf %7, %7 : vector<256x64xf32>
    %cst_2 = arith.constant dense<0.000000e+00> : vector<256xf32>
    %9 = vector.multi_reduction <add>, %8, %cst_2 [1] : vector<256x64xf32> to vector<256xf32>
    %10 = vector.shape_cast %9 : vector<256xf32> to vector<256x1xf32>
    %cst_3 = arith.constant 6.400000e+01 : f32
    %11 = vector.broadcast %cst_3 : f32 to vector<256x1xf32>
    %12 = arith.divf %10, %11 : vector<256x1xf32>
    %cst_4 = arith.constant 9.99999974E-6 : f32
    %13 = vector.broadcast %cst_4 : f32 to vector<256x1xf32>
    %14 = arith.addf %12, %13 : vector<256x1xf32>
    %15 = math.rsqrt %14 : vector<256x1xf32>
    %16 = vector.broadcast %15 : vector<256x1xf32> to vector<256x64xf32>
    %17 = arith.mulf %7, %16 : vector<256x64xf32>
    %c0_5 = arith.constant 0 : index
    %c0_6 = arith.constant 0 : index
    %18 = vector.load %arg2[%c0_5, %c0_6] : memref<1x64xf32, #tpu.memory_space<vmem>>, vector<1x64xf32>
    %19 = vector.broadcast %18 : vector<1x64xf32> to vector<256x64xf32>
    %20 = arith.mulf %17, %19 : vector<256x64xf32>
    %c0_7 = arith.constant 0 : index
    %c0_8 = arith.constant 0 : index
    %21 = vector.load %arg3[%c0_7, %c0_8] : memref<1x64xf32, #tpu.memory_space<vmem>>, vector<1x64xf32>
    %22 = vector.broadcast %21 : vector<1x64xf32> to vector<256x64xf32>
    %23 = arith.addf %20, %22 : vector<256x64xf32>
    %24 = arith.truncf %23 : vector<256x64xf32> to vector<256x64xbf16>
    %c0_9 = arith.constant 0 : index
    %c0_10 = arith.constant 0 : index
    %25 = vector.load %arg4[%c0_9, %c0_10] : memref<256x64xbf16, #tpu.memory_space<vmem>>, vector<256x64xbf16>
    tpu.vector_store %arg4[%c0_9, %c0_10], %24 {strides = array<i32>} : memref<256x64xbf16, #tpu.memory_space<vmem>>, vector<256x64xbf16>,
    return
  }
  func.func @transform_0(%arg0: i32) -> (i32, i32) {
    %c0_i32 = arith.constant 0 : i32
    %c0_i32_0 = arith.constant 0 : i32
    return %arg0, %c0_i32 : i32, i32
  }
  func.func @transform_1(%arg0: i32) -> (i32, i32) {
    %c0_i32 = arith.constant 0 : i32
    %c0_i32_0 = arith.constant 0 : i32
    %c0_i32_1 = arith.constant 0 : i32
    return %c0_i32, %c0_i32_0 : i32, i32
  }
  func.func @transform_2(%arg0: i32) -> (i32, i32) {
    %c0_i32 = arith.constant 0 : i32
    %c0_i32_0 = arith.constant 0 : i32
    %c0_i32_1 = arith.constant 0 : i32
    return %c0_i32, %c0_i32_0 : i32, i32
  }
  func.func @transform_3(%arg0: i32) -> (i32, i32) {
    %c0_i32 = arith.constant 0 : i32
    %c0_i32_0 = arith.constant 0 : i32
    return %arg0, %c0_i32 : i32, i32
  }
}

module attributes {stable_mosaic.version = 11 : i64} {
  func.func @_matmul_kernel_1k(%arg0: i32, %arg1: i32, %arg2: memref<256x147xbf16, #tpu.memory_space<vmem>>, %arg3: memref<147x64xbf16, #tpu.memory_space<vmem>>, %arg4: memref<1x64xf32, #tpu.memory_space<vmem>>, %arg5: memref<256x64xbf16, #tpu.memory_space<vmem>>) attributes {dimension_semantics = [#tpu.dimension_semantics<parallel>, #tpu.dimension_semantics<parallel>], iteration_bounds = array<i64: 2, 1>, scalar_prefetch = 0 : i64, scratch_operands = 0 : i64, tpu.core_type = #tpu.core_type<tc>, window_params = [{transform_indices = @transform_0, window_bounds = array<i64: 256, 147>}, {transform_indices = @transform_1, window_bounds = array<i64: 147, 64>}, {transform_indices = @transform_2, window_bounds = array<i64: 1, 64>}, {transform_indices = @transform_3, window_bounds = array<i64: 256, 64>}]} {
    %c0 = arith.constant 0 : index
    %c0_0 = arith.constant 0 : index
    %0 = vector.load %arg2[%c0, %c0_0] : memref<256x147xbf16, #tpu.memory_space<vmem>>, vector<256x147xbf16>
    %c0_1 = arith.constant 0 : index
    %c0_2 = arith.constant 0 : index
    %1 = vector.load %arg3[%c0_1, %c0_2] : memref<147x64xbf16, #tpu.memory_space<vmem>>, vector<147x64xbf16>
    %cst = arith.constant dense<0.000000e+00> : vector<256x64xf32>
    %2 = tpu.matmul %0, %1, %cst {dimension_numbers = #tpu.dot_dimension_numbers<[1], [0], [0], [1], [0, 0, 1, 1], [], []>} : vector<256x147xbf16>, vector<147x64xbf16>, vector<256x64xf32> -> vector<256x64xf32>
    %c0_3 = arith.constant 0 : index
    %c0_4 = arith.constant 0 : index
    %3 = vector.load %arg4[%c0_3, %c0_4] : memref<1x64xf32, #tpu.memory_space<vmem>>, vector<1x64xf32>
    %4 = vector.broadcast %3 : vector<1x64xf32> to vector<256x64xf32>
    %5 = arith.addf %2, %4 : vector<256x64xf32>
    %6 = arith.truncf %5 : vector<256x64xf32> to vector<256x64xbf16>
    %c0_5 = arith.constant 0 : index
    %c0_6 = arith.constant 0 : index
    %7 = vector.load %arg5[%c0_5, %c0_6] : memref<256x64xbf16, #tpu.memory_space<vmem>>, vector<256x64xbf16>
    tpu.vector_store %arg5[%c0_5, %c0_6], %6 {strides = array<i32>} : memref<256x64xbf16, #tpu.memory_space<vmem>>, vector<256x64xbf16>,
    return
  }
  func.func @transform_0(%arg0: i32, %arg1: i32) -> (i32, i32) {
    %c0_i32 = arith.constant 0 : i32
    %c0_i32_0 = arith.constant 0 : i32
    return %arg0, %c0_i32 : i32, i32
  }
  func.func @transform_1(%arg0: i32, %arg1: i32) -> (i32, i32) {
    %c0_i32 = arith.constant 0 : i32
    %c0_i32_0 = arith.constant 0 : i32
    return %c0_i32, %arg1 : i32, i32
  }
  func.func @transform_2(%arg0: i32, %arg1: i32) -> (i32, i32) {
    %c0_i32 = arith.constant 0 : i32
    %c0_i32_0 = arith.constant 0 : i32
    return %c0_i32, %arg1 : i32, i32
  }
  func.func @transform_3(%arg0: i32, %arg1: i32) -> (i32, i32) {
    %c0_i32 = arith.constant 0 : i32
    return %arg0, %arg1 : i32, i32
  }
}

</mosaic_0001>

<llo_original>
// kernel: patch_embed.3
$region0: #{patch_embed.3}
  #allocation0 [shape = 'u32[]', space=smem, size = 0x4, offset = 0x4, fixed_abs, tag = 'smem constant byte address 0x4 - core index']
  #allocation1 [shape = 'u32[144,128]{1,0:T(1,128)}', space=vmem, size = 0x12000, scoped, tag = 'internal scratch']
  %s0 = inlined_call_operand.vmem [shape: bf16[512,64], index: 0, kind: input, shape index: {}]
  %s1 = inlined_call_operand.vmem [shape: f32[1,64], index: 1, kind: input, shape index: {}]
  %s2 = inlined_call_operand.vmem [shape: f32[1,64], index: 2, kind: input, shape index: {}]
  %s3 = inlined_call_operand.vmem [shape: bf16[512,64], index: 3, kind: output, shape index: {}]
  %s4 = sld [smem:[#allocation0]]
  $region45: #{patch_embed.3} parent=0
    _
  %s6 = ssub.s32 1, %s4
  %s7 = scalar_select 0, %s6, %s4
  loop: start=0, step=1, limit=4
  $region2: #{patch_embed.3} parent=0 // loop_pre_header
    _
  $region3: #{patch_embed.3} parent=0 // loop_header
    %s9 = sphi 0, %s13
    %p10 = scmp.ge.s32.totalorder %s9, 4
    %s19 = sphi 0, %s21
    %s22 = sphi 0, %s19
    %s23 = sphi 0, %s22
    %s39 = sphi 0, %s23
    %s43 = sphi 0, %s43
    %s45 = sphi 0, %s43
    %s46 = sphi 0, %s45
    %s60 = sphi 0, %s46
    %s64 = sphi 0, %s64
    %s66 = sphi 0, %s64
    %s67 = sphi 0, %s66
    %s81 = sphi 0, %s67
    %s87 = sphi 0, %s89
    %s90 = sphi 0, %s87
    %s91 = sphi 0, %s90
    %s107 = sphi 0, %s91
  $region4: #{patch_embed.3} parent=0 // loop_header_branch
    %12 = sbr.rel (%p10) target = $region8
  $region5: #{patch_embed.3} parent=0 // loop_body
    %s14 = ssub.s32 %s9, 1
    %s15 = ssub.s32 %s9, 2
    %s16 = sadd.s32 %s9, 1
    %s17 = ssub.s32 %s9, %s16
    %p18 = scmp.eq.s32.totalorder %s17, 0
    %s20 = sadd.s32 %s19, 1
    %s21 = scalar_select %p18, %s19, %s20
    %p24 = pneg %p18
    %p25 = scmp.eq.s32.totalorder %s9, 1
    %p26 = por %p24, %p25
    %p27 = scmp.ne.s32.totalorder %s19, %s22
    %p28 = scmp.eq.s32.totalorder %s9, 0
    %p29 = por %p27, %p28
    %p30 = scmp.ne.s32.totalorder %s19, %s22
    %p31 = scmp.eq.s32.totalorder %s14, 1
    %p32 = por %p30, %p31
    %p33 = scmp.ne.s32.totalorder %s22, %s23
    %p34 = scmp.eq.s32.totalorder %s14, 0
    %p35 = por %p33, %p34
    %p36 = scmp.ne.s32.totalorder %s22, %s23
    %p37 = scmp.eq.s32.totalorder %s15, 1
    %p38 = por %p36, %p37
    %p40 = scmp.ne.s32.totalorder %s23, %s39
    %p41 = scmp.eq.s32.totalorder %s15, 0
    %p42 = por %p40, %p41
    %s44 = sadd.s32 %s43, 1
    %p47 = scmp.eq.s32.totalorder %s9, 1
    %p48 = scmp.ne.s32.totalorder %s43, %s45
    %p49 = scmp.eq.s32.totalorder %s9, 0
    %p50 = por %p48, %p49
    %p51 = scmp.ne.s32.totalorder %s43, %s45
    %p52 = scmp.eq.s32.totalorder %s14, 1
    %p53 = por %p51, %p52
    %p54 = scmp.ne.s32.totalorder %s45, %s46
    %p55 = scmp.eq.s32.totalorder %s14, 0
    %p56 = por %p54, %p55
    %p57 = scmp.ne.s32.totalorder %s45, %s46
    %p58 = scmp.eq.s32.totalorder %s15, 1
    %p59 = por %p57, %p58
    %p61 = scmp.ne.s32.totalorder %s46, %s60
    %p62 = scmp.eq.s32.totalorder %s15, 0
    %p63 = por %p61, %p62
    %s65 = sadd.s32 %s64, 1
    %p68 = scmp.eq.s32.totalorder %s9, 1
    %p69 = scmp.ne.s32.totalorder %s64, %s66
    %p70 = scmp.eq.s32.totalorder %s9, 0
    %p71 = por %p69, %p70
    %p72 = scmp.ne.s32.totalorder %s64, %s66
    %p73 = scmp.eq.s32.totalorder %s14, 1
    %p74 = por %p72, %p73
    %p75 = scmp.ne.s32.totalorder %s66, %s67
    %p76 = scmp.eq.s32.totalorder %s14, 0
    %p77 = por %p75, %p76
    %p78 = scmp.ne.s32.totalorder %s66, %s67
    %p79 = scmp.eq.s32.totalorder %s15, 1
    %p80 = por %p78, %p79
    %p82 = scmp.ne.s32.totalorder %s67, %s81
    %p83 = scmp.eq.s32.totalorder %s15, 0
    %p84 = por %p82, %p83
    %s85 = ssub.s32 %s9, %s16
    %p86 = scmp.eq.s32.totalorder %s85, 0
    %s88 = sadd.s32 %s87, 1
    %s89 = scalar_select %p86, %s87, %s88
    %p92 = pneg %p86
    %p93 = scmp.eq.s32.totalorder %s9, 1
    %p94 = por %p92, %p93
    %p95 = scmp.ne.s32.totalorder %s87, %s90
    %p96 = scmp.eq.s32.totalorder %s9, 0
    %p97 = por %p95, %p96
    %p98 = scmp.ne.s32.totalorder %s87, %s90
    %p99 = scmp.eq.s32.totalorder %s14, 1
    %p100 = por %p98, %p99
    %p101 = scmp.ne.s32.totalorder %s90, %s91
    %p102 = scmp.eq.s32.totalorder %s14, 0
    %p103 = por %p101, %p102
    %p104 = scmp.ne.s32.totalorder %s90, %s91
    %p105 = scmp.eq.s32.totalorder %s15, 1
    %p106 = por %p104, %p105
    %p108 = scmp.ne.s32.totalorder %s91, %s107
    %p109 = scmp.eq.s32.totalorder %s15, 0
    %p110 = por %p108, %p109
    %p111 = scmp.le.s32.totalorder 1, %s9
    %p112 = scmp.lt.s32.totalorder %s9, 3
    %p113 = pnand %p111, %p112
    %p114 = pneg %p113
    // Predicated region
    $region9: #{patch_embed.3} parent=5 // pred_check
      _
    $region10: #{patch_embed.3} parent=5 // pred_check_branch
      %116 = sbr.rel (%p113) target = $region12
    $region11: #{patch_embed.3} parent=5 // pred_region
      %s117 = ssub.s32 %s9, 1
      // Predicated region
      $region13: #{patch_embed.3} parent=11 // pred_check
        %p118 = pneg %p56
      $region14: #{patch_embed.3} parent=11 // pred_check_branch
        %120 = sbr.rel (%p118) target = $region16
      $region15: #{patch_embed.3} parent=11 // pred_region
        _
      $region16: #{patch_embed.3} parent=11 // pred_fallthru
        _
      // Predicated region
      $region17: #{patch_embed.3} parent=11 // pred_check
        %p121 = pneg %p77
      $region18: #{patch_embed.3} parent=11 // pred_check_branch
        %123 = sbr.rel (%p121) target = $region20
      $region19: #{patch_embed.3} parent=11 // pred_region
        _
      $region20: #{patch_embed.3} parent=11 // pred_fallthru
        _
    $region12: #{patch_embed.3} parent=5 // pred_fallthru
      _
    %p124 = scmp.lt.s32.totalorder %s9, 2
    // Predicated region
    $region21: #{patch_embed.3} parent=5 // pred_check
      %p125 = pneg %p124
    $region22: #{patch_embed.3} parent=5 // pred_check_branch
      %127 = sbr.rel (%p125) target = $region24
    $region23: #{patch_embed.3} parent=5 // pred_region
      // Predicated region
      $region25: #{patch_embed.3} parent=23 // pred_check
        %p128 = pneg %p29
      $region26: #{patch_embed.3} parent=23 // pred_check_branch
        %130 = sbr.rel (%p128) target = $region28
      $region27: #{patch_embed.3} parent=23 // pred_region
        %s131 = smul.u32 32, %s9
        %p132 = scmp.lt.s32.totalorder %s131, 63
        %s133 = scalar_select %p132, %s131, 63
        %s134 = smul.addr %s133, 4
        %s135 = scalar_lea.vmem %s0, %s134
        %s136 = smul.u32 32, %s9
      $region28: #{patch_embed.3} parent=23 // pred_fallthru
        _
    $region24: #{patch_embed.3} parent=5 // pred_fallthru
      _
    %p137 = scmp.le.s32.totalorder 1, %s9
    %p138 = scmp.lt.s32.totalorder %s9, 3
    %p139 = pnand %p137, %p138
    %p140 = pneg %p139
    // Predicated region
    $region29: #{patch_embed.3} parent=5 // pred_check
      _
    $region30: #{patch_embed.3} parent=5 // pred_check_branch
      %142 = sbr.rel (%p139) target = $region32
    $region31: #{patch_embed.3} parent=5 // pred_region
      %s143 = ssub.s32 %s9, 1
      %s144 = smul.u32 32, %s14
      %p145 = scmp.lt.s32.totalorder %s144, 63
      %s146 = scalar_select %p145, %s144, 63
      %s147 = smul.addr %s146, 4
      %s148 = scalar_lea.vmem %s0, %s147
      %p149 = pneg %p35
      %p150 = pneg %p32
      %p151 = pneg %p56
      %p152 = pneg %p53
      %p153 = pneg %p77
      %p154 = pneg %p74
      %p155 = pneg %p103
      %p156 = pneg %p100
      %s157 = smul.u32 32, %s14
      %p158 = scmp.lt.s32.totalorder %s157, 63
      %s159 = scalar_select %p158, %s157, 63
      %s160 = smul.addr %s159, 4
      %s161 = scalar_lea.vmem %s3, %s160
      %s162 = smul.u32 32, %s14
      %p163 = scmp.lt.s32.totalorder %s162, 63
      %s164 = scalar_select %p163, %s162, 63
      %s165 = smul.addr %s164, 4
      %s166 = scalar_lea.vmem %s0, %s165
      %s167 = smul.u32 32, %s14
      %s168 = smul.u32 32, %s14
      %p169 = scmp.lt.s32.totalorder %s168, 63
      %s170 = scalar_select %p169, %s168, 63
      %s171 = smul.addr %s170, 4
      %s172 = scalar_lea.vmem %s3, %s171
      %s173 = smul.u32 32, %s14
      %v174 = vld [vmem:[%s166] sm:$0xf]
      %v175 = vld [vmem:[%s166 + $0x4] sm:$0xf]
      %v176 = vld [vmem:[%s166 + $0x8] sm:$0xf]
      %v177 = vld [vmem:[%s166 + $0xc] sm:$0xf]
      %v178 = vld [vmem:[%s166 + $0x10] sm:$0xf]
      %v179 = vld [vmem:[%s166 + $0x14] sm:$0xf]
      %v180 = vld [vmem:[%s166 + $0x18] sm:$0xf]
      %v181 = vld [vmem:[%s166 + $0x1c] sm:$0xf]
      %v182 = vld [vmem:[%s166 + $0x20] sm:$0xf]
      %v183 = vld [vmem:[%s166 + $0x24] sm:$0xf]
      %v184 = vld [vmem:[%s166 + $0x28] sm:$0xf]
      %v185 = vld [vmem:[%s166 + $0x2c] sm:$0xf]
      %v186 = vld [vmem:[%s166 + $0x30] sm:$0xf]
      %v187 = vld [vmem:[%s166 + $0x34] sm:$0xf]
      %v188 = vld [vmem:[%s166 + $0x38] sm:$0xf]
      %v189 = vld [vmem:[%s166 + $0x3c] sm:$0xf]
      %v190 = vld [vmem:[%s166 + $0x40] sm:$0xf]
      %v191 = vld [vmem:[%s166 + $0x44] sm:$0xf]
      %v192 = vld [vmem:[%s166 + $0x48] sm:$0xf]
      %v193 = vld [vmem:[%s166 + $0x4c] sm:$0xf]
      %v194 = vld [vmem:[%s166 + $0x50] sm:$0xf]
      %v195 = vld [vmem:[%s166 + $0x54] sm:$0xf]
      %v196 = vld [vmem:[%s166 + $0x58] sm:$0xf]
      %v197 = vld [vmem:[%s166 + $0x5c] sm:$0xf]
      %v198 = vld [vmem:[%s166 + $0x60] sm:$0xf]
      %v199 = vld [vmem:[%s166 + $0x64] sm:$0xf]
      %v200 = vld [vmem:[%s166 + $0x68] sm:$0xf]
      %v201 = vld [vmem:[%s166 + $0x6c] sm:$0xf]
      %v202 = vld [vmem:[%s166 + $0x70] sm:$0xf]
      %v203 = vld [vmem:[%s166 + $0x74] sm:$0xf]
      %v204 = vld [vmem:[%s166 + $0x78] sm:$0xf]
      %v205 = vld [vmem:[%s166 + $0x7c] sm:$0xf]
      %v206 = vunpack.c.l.bf16 %v174
      %v207 = vunpack.c.l.bf16 %v175
      %v208 = vunpack.c.l.bf16 %v176
      %v209 = vunpack.c.l.bf16 %v177
      %v210 = vunpack.c.l.bf16 %v178
      %v211 = vunpack.c.l.bf16 %v179
      %v212 = vunpack.c.l.bf16 %v180
      %v213 = vunpack.c.l.bf16 %v181
      %v214 = vunpack.c.l.bf16 %v182
      %v215 = vunpack.c.l.bf16 %v183
      %v216 = vunpack.c.l.bf16 %v184
      %v217 = vunpack.c.l.bf16 %v185
      %v218 = vunpack.c.l.bf16 %v186
      %v219 = vunpack.c.l.bf16 %v187
      %v220 = vunpack.c.l.bf16 %v188
      %v221 = vunpack.c.l.bf16 %v189
      %v222 = vunpack.c.l.bf16 %v190
      %v223 = vunpack.c.l.bf16 %v191
      %v224 = vunpack.c.l.bf16 %v192
      %v225 = vunpack.c.l.bf16 %v193
      %v226 = vunpack.c.l.bf16 %v194
      %v227 = vunpack.c.l.bf16 %v195
      %v228 = vunpack.c.l.bf16 %v196
      %v229 = vunpack.c.l.bf16 %v197
      %v230 = vunpack.c.l.bf16 %v198
      %v231 = vunpack.c.l.bf16 %v199
      %v232 = vunpack.c.l.bf16 %v200
      %v233 = vunpack.c.l.bf16 %v201
      %v234 = vunpack.c.l.bf16 %v202
      %v235 = vunpack.c.l.bf16 %v203
      %v236 = vunpack.c.l.bf16 %v204
      %v237 = vunpack.c.l.bf16 %v205
      %vm238 = vcmask 523264
      %v239 = vsel %vm238, %v206, 0.0
      %240 = vadd.xlane.f32.xlu0 %v239
      %v241 = vpop.xlane.xlu0 %240
      %v242 = vsel %vm238, %v207, 0.0
      %243 = vadd.xlane.f32.xlu0 %v242
      %v244 = vpop.xlane.xlu0 %243
      %v245 = vsel %vm238, %v208, 0.0
      %246 = vadd.xlane.f32.xlu0 %v245
      %v247 = vpop.xlane.xlu0 %246
      %v248 = vsel %vm238, %v209, 0.0
      %249 = vadd.xlane.f32.xlu0 %v248
      %v250 = vpop.xlane.xlu0 %249
      %v251 = vsel %vm238, %v210, 0.0
      %252 = vadd.xlane.f32.xlu0 %v251
      %v253 = vpop.xlane.xlu0 %252
      %v254 = vsel %vm238, %v211, 0.0
      %255 = vadd.xlane.f32.xlu0 %v254
      %v256 = vpop.xlane.xlu0 %255
      %v257 = vsel %vm238, %v212, 0.0
      %258 = vadd.xlane.f32.xlu0 %v257
      %v259 = vpop.xlane.xlu0 %258
      %v260 = vsel %vm238, %v213, 0.0
      %261 = vadd.xlane.f32.xlu0 %v260
      %v262 = vpop.xlane.xlu0 %261
      %v263 = vsel %vm238, %v214, 0.0
      %264 = vadd.xlane.f32.xlu0 %v263
      %v265 = vpop.xlane.xlu0 %264
      %v266 = vsel %vm238, %v215, 0.0
      %267 = vadd.xlane.f32.xlu0 %v266
      %v268 = vpop.xlane.xlu0 %267
      %v269 = vsel %vm238, %v216, 0.0
      %270 = vadd.xlane.f32.xlu0 %v269
      %v271 = vpop.xlane.xlu0 %270
      %v272 = vsel %vm238, %v217, 0.0
      %273 = vadd.xlane.f32.xlu0 %v272
      %v274 = vpop.xlane.xlu0 %273
      %v275 = vsel %vm238, %v218, 0.0
      %276 = vadd.xlane.f32.xlu0 %v275
      %v277 = vpop.xlane.xlu0 %276
      %v278 = vsel %vm238, %v219, 0.0
      %279 = vadd.xlane.f32.xlu0 %v278
      %v280 = vpop.xlane.xlu0 %279
      %v281 = vsel %vm238, %v220, 0.0
      %282 = vadd.xlane.f32.xlu0 %v281
      %v283 = vpop.xlane.xlu0 %282
      %v284 = vsel %vm238, %v221, 0.0
      %285 = vadd.xlane.f32.xlu0 %v284
      %v286 = vpop.xlane.xlu0 %285
      %v287 = vsel %vm238, %v222, 0.0
      %288 = vadd.xlane.f32.xlu0 %v287
      %v289 = vpop.xlane.xlu0 %288
      %v290 = vsel %vm238, %v223, 0.0
      %291 = vadd.xlane.f32.xlu0 %v290
      %v292 = vpop.xlane.xlu0 %291
      %v293 = vsel %vm238, %v224, 0.0
      %294 = vadd.xlane.f32.xlu0 %v293
      %v295 = vpop.xlane.xlu0 %294
      %v296 = vsel %vm238, %v225, 0.0
      %297 = vadd.xlane.f32.xlu0 %v296
      %v298 = vpop.xlane.xlu0 %297
      %v299 = vsel %vm238, %v226, 0.0
      %300 = vadd.xlane.f32.xlu0 %v299
      %v301 = vpop.xlane.xlu0 %300
      %v302 = vsel %vm238, %v227, 0.0
      %303 = vadd.xlane.f32.xlu0 %v302
      %v304 = vpop.xlane.xlu0 %303
      %v305 = vsel %vm238, %v228, 0.0
      %306 = vadd.xlane.f32.xlu0 %v305
      %v307 = vpop.xlane.xlu0 %306
      %v308 = vsel %vm238, %v229, 0.0
      %309 = vadd.xlane.f32.xlu0 %v308
      %v310 = vpop.xlane.xlu0 %309
      %v311 = vsel %vm238, %v230, 0.0
      %312 = vadd.xlane.f32.xlu0 %v311
      %v313 = vpop.xlane.xlu0 %312
      %v314 = vsel %vm238, %v231, 0.0
      %315 = vadd.xlane.f32.xlu0 %v314
      %v316 = vpop.xlane.xlu0 %315
      %v317 = vsel %vm238, %v232, 0.0
      %318 = vadd.xlane.f32.xlu0 %v317
      %v319 = vpop.xlane.xlu0 %318
      %v320 = vsel %vm238, %v233, 0.0
      %321 = vadd.xlane.f32.xlu0 %v320
      %v322 = vpop.xlane.xlu0 %321
      %v323 = vsel %vm238, %v234, 0.0
      %324 = vadd.xlane.f32.xlu0 %v323
      %v325 = vpop.xlane.xlu0 %324
      %v326 = vsel %vm238, %v235, 0.0
      %327 = vadd.xlane.f32.xlu0 %v326
      %v328 = vpop.xlane.xlu0 %327
      %v329 = vsel %vm238, %v236, 0.0
      %330 = vadd.xlane.f32.xlu0 %v329
      %v331 = vpop.xlane.xlu0 %330
      %v332 = vsel %vm238, %v237, 0.0
      %333 = vadd.xlane.f32.xlu0 %v332
      %v334 = vpop.xlane.xlu0 %333
      %v335 = vrcp.pop 64.0
      %v336 = vmul.f32 %v241, %v335
      %v337 = vmul.f32 %v244, %v335
      %v338 = vmul.f32 %v247, %v335
      %v339 = vmul.f32 %v250, %v335
      %v340 = vmul.f32 %v253, %v335
      %v341 = vmul.f32 %v256, %v335
      %v342 = vmul.f32 %v259, %v335
      %v343 = vmul.f32 %v262, %v335
      %v344 = vmul.f32 %v265, %v335
      %v345 = vmul.f32 %v268, %v335
      %v346 = vmul.f32 %v271, %v335
      %v347 = vmul.f32 %v274, %v335
      %v348 = vmul.f32 %v277, %v335
      %v349 = vmul.f32 %v280, %v335
      %v350 = vmul.f32 %v283, %v335
      %v351 = vmul.f32 %v286, %v335
      %v352 = vmul.f32 %v289, %v335
      %v353 = vmul.f32 %v292, %v335
      %v354 = vmul.f32 %v295, %v335
      %v355 = vmul.f32 %v298, %v335
      %v356 = vmul.f32 %v301, %v335
      %v357 = vmul.f32 %v304, %v335
      %v358 = vmul.f32 %v307, %v335
      %v359 = vmul.f32 %v310, %v335
      %v360 = vmul.f32 %v313, %v335
      %v361 = vmul.f32 %v316, %v335
      %v362 = vmul.f32 %v319, %v335
      %v363 = vmul.f32 %v322, %v335
      %v364 = vmul.f32 %v325, %v335
      %v365 = vmul.f32 %v328, %v335
      %v366 = vmul.f32 %v331, %v335
      %v367 = vmul.f32 %v334, %v335
      %v368 = vsub.f32 %v206, %v336
      %v369 = vsub.f32 %v207, %v337
      %v370 = vsub.f32 %v208, %v338
      %v371 = vsub.f32 %v209, %v339
      %v372 = vsub.f32 %v210, %v340
      %v373 = vsub.f32 %v211, %v341
      %v374 = vsub.f32 %v212, %v342
      %v375 = vsub.f32 %v213, %v343
      %v376 = vsub.f32 %v214, %v344
      %v377 = vsub.f32 %v215, %v345
      %v378 = vsub.f32 %v216, %v346
      %v379 = vsub.f32 %v217, %v347
      %v380 = vsub.f32 %v218, %v348
      %v381 = vsub.f32 %v219, %v349
      %v382 = vsub.f32 %v220, %v350
      %v383 = vsub.f32 %v221, %v351
      %v384 = vsub.f32 %v222, %v352
      %v385 = vsub.f32 %v223, %v353
      %v386 = vsub.f32 %v224, %v354
      %v387 = vsub.f32 %v225, %v355
      %v388 = vsub.f32 %v226, %v356
      %v389 = vsub.f32 %v227, %v357
      %v390 = vsub.f32 %v228, %v358
      %v391 = vsub.f32 %v229, %v359
      %v392 = vsub.f32 %v230, %v360
      %v393 = vsub.f32 %v231, %v361
      %v394 = vsub.f32 %v232, %v362
      %v395 = vsub.f32 %v233, %v363
      %v396 = vsub.f32 %v234, %v364
      %v397 = vsub.f32 %v235, %v365
      %v398 = vsub.f32 %v236, %v366
      %v399 = vsub.f32 %v237, %v367
      %v400 = vmul.f32 %v368, %v368
      %v401 = vmul.f32 %v369, %v369
      %v402 = vmul.f32 %v370, %v370
      %v403 = vmul.f32 %v371, %v371
      %v404 = vmul.f32 %v372, %v372
      %v405 = vmul.f32 %v373, %v373
      %v406 = vmul.f32 %v374, %v374
      %v407 = vmul.f32 %v375, %v375
      %v408 = vmul.f32 %v376, %v376
      %v409 = vmul.f32 %v377, %v377
      %v410 = vmul.f32 %v378, %v378
      %v411 = vmul.f32 %v379, %v379
      %v412 = vmul.f32 %v380, %v380
      %v413 = vmul.f32 %v381, %v381
      %v414 = vmul.f32 %v382, %v382
      %v415 = vmul.f32 %v383, %v383
      %v416 = vmul.f32 %v384, %v384
      %v417 = vmul.f32 %v385, %v385
      %v418 = vmul.f32 %v386, %v386
      %v419 = vmul.f32 %v387, %v387
      %v420 = vmul.f32 %v388, %v388
      %v421 = vmul.f32 %v389, %v389
      %v422 = vmul.f32 %v390, %v390
      %v423 = vmul.f32 %v391, %v391
      %v424 = vmul.f32 %v392, %v392
      %v425 = vmul.f32 %v393, %v393
      %v426 = vmul.f32 %v394, %v394
      %v427 = vmul.f32 %v395, %v395
      %v428 = vmul.f32 %v396, %v396
      %v429 = vmul.f32 %v397, %v397
      %v430 = vmul.f32 %v398, %v398
      %v431 = vmul.f32 %v399, %v399
      %v432 = vsel %vm238, %v400, 0.0
      %433 = vadd.xlane.f32.xlu0 %v432
      %v434 = vpop.xlane.xlu0 %433
      %v435 = vsel %vm238, %v401, 0.0
      %436 = vadd.xlane.f32.xlu0 %v435
      %v437 = vpop.xlane.xlu0 %436
      %v438 = vsel %vm238, %v402, 0.0
      %439 = vadd.xlane.f32.xlu0 %v438
      %v440 = vpop.xlane.xlu0 %439
      %v441 = vsel %vm238, %v403, 0.0
      %442 = vadd.xlane.f32.xlu0 %v441
      %v443 = vpop.xlane.xlu0 %442
      %v444 = vsel %vm238, %v404, 0.0
      %445 = vadd.xlane.f32.xlu0 %v444
      %v446 = vpop.xlane.xlu0 %445
      %v447 = vsel %vm238, %v405, 0.0
      %448 = vadd.xlane.f32.xlu0 %v447
      %v449 = vpop.xlane.xlu0 %448
      %v450 = vsel %vm238, %v406, 0.0
      %451 = vadd.xlane.f32.xlu0 %v450
      %v452 = vpop.xlane.xlu0 %451
      %v453 = vsel %vm238, %v407, 0.0
      %454 = vadd.xlane.f32.xlu0 %v453
      %v455 = vpop.xlane.xlu0 %454
      %v456 = vsel %vm238, %v408, 0.0
      %457 = vadd.xlane.f32.xlu0 %v456
      %v458 = vpop.xlane.xlu0 %457
      %v459 = vsel %vm238, %v409, 0.0
      %460 = vadd.xlane.f32.xlu0 %v459
      %v461 = vpop.xlane.xlu0 %460
      %v462 = vsel %vm238, %v410, 0.0
      %463 = vadd.xlane.f32.xlu0 %v462
      %v464 = vpop.xlane.xlu0 %463
      %v465 = vsel %vm238, %v411, 0.0
      %466 = vadd.xlane.f32.xlu0 %v465
      %v467 = vpop.xlane.xlu0 %466
      %v468 = vsel %vm238, %v412, 0.0
      %469 = vadd.xlane.f32.xlu0 %v468
      %v470 = vpop.xlane.xlu0 %469
      %v471 = vsel %vm238, %v413, 0.0
      %472 = vadd.xlane.f32.xlu0 %v471
      %v473 = vpop.xlane.xlu0 %472
      %v474 = vsel %vm238, %v414, 0.0
      %475 = vadd.xlane.f32.xlu0 %v474
      %v476 = vpop.xlane.xlu0 %475
      %v477 = vsel %vm238, %v415, 0.0
      %478 = vadd.xlane.f32.xlu0 %v477
      %v479 = vpop.xlane.xlu0 %478
      %v480 = vsel %vm238, %v416, 0.0
      %481 = vadd.xlane.f32.xlu0 %v480
      %v482 = vpop.xlane.xlu0 %481
      %v483 = vsel %vm238, %v417, 0.0
      %484 = vadd.xlane.f32.xlu0 %v483
      %v485 = vpop.xlane.xlu0 %484
      %v486 = vsel %vm238, %v418, 0.0
      %487 = vadd.xlane.f32.xlu0 %v486
      %v488 = vpop.xlane.xlu0 %487
      %v489 = vsel %vm238, %v419, 0.0
      %490 = vadd.xlane.f32.xlu0 %v489
      %v491 = vpop.xlane.xlu0 %490
      %v492 = vsel %vm238, %v420, 0.0
      %493 = vadd.xlane.f32.xlu0 %v492
      %v494 = vpop.xlane.xlu0 %493
      %v495 = vsel %vm238, %v421, 0.0
      %496 = vadd.xlane.f32.xlu0 %v495
      %v497 = vpop.xlane.xlu0 %496
      %v498 = vsel %vm238, %v422, 0.0
      %499 = vadd.xlane.f32.xlu0 %v498
      %v500 = vpop.xlane.xlu0 %499
      %v501 = vsel %vm238, %v423, 0.0
      %502 = vadd.xlane.f32.xlu0 %v501
      %v503 = vpop.xlane.xlu0 %502
      %v504 = vsel %vm238, %v424, 0.0
      %505 = vadd.xlane.f32.xlu0 %v504
      %v506 = vpop.xlane.xlu0 %505
      %v507 = vsel %vm238, %v425, 0.0
      %508 = vadd.xlane.f32.xlu0 %v507
      %v509 = vpop.xlane.xlu0 %508
      %v510 = vsel %vm238, %v426, 0.0
      %511 = vadd.xlane.f32.xlu0 %v510
      %v512 = vpop.xlane.xlu0 %511
      %v513 = vsel %vm238, %v427, 0.0
      %514 = vadd.xlane.f32.xlu0 %v513
      %v515 = vpop.xlane.xlu0 %514
      %v516 = vsel %vm238, %v428, 0.0
      %517 = vadd.xlane.f32.xlu0 %v516
      %v518 = vpop.xlane.xlu0 %517
      %v519 = vsel %vm238, %v429, 0.0
      %520 = vadd.xlane.f32.xlu0 %v519
      %v521 = vpop.xlane.xlu0 %520
      %v522 = vsel %vm238, %v430, 0.0
      %523 = vadd.xlane.f32.xlu0 %v522
      %v524 = vpop.xlane.xlu0 %523
      %v525 = vsel %vm238, %v431, 0.0
      %526 = vadd.xlane.f32.xlu0 %v525
      %v527 = vpop.xlane.xlu0 %526
      %v528 = vmul.f32 %v434, %v335
      %v529 = vmul.f32 %v437, %v335
      %v530 = vmul.f32 %v440, %v335
      %v531 = vmul.f32 %v443, %v335
      %v532 = vmul.f32 %v446, %v335
      %v533 = vmul.f32 %v449, %v335
      %v534 = vmul.f32 %v452, %v335
      %v535 = vmul.f32 %v455, %v335
      %v536 = vmul.f32 %v458, %v335
      %v537 = vmul.f32 %v461, %v335
      %v538 = vmul.f32 %v464, %v335
      %v539 = vmul.f32 %v467, %v335
      %v540 = vmul.f32 %v470, %v335
      %v541 = vmul.f32 %v473, %v335
      %v542 = vmul.f32 %v476, %v335
      %v543 = vmul.f32 %v479, %v335
      %v544 = vmul.f32 %v482, %v335
      %v545 = vmul.f32 %v485, %v335
      %v546 = vmul.f32 %v488, %v335
      %v547 = vmul.f32 %v491, %v335
      %v548 = vmul.f32 %v494, %v335
      %v549 = vmul.f32 %v497, %v335
      %v550 = vmul.f32 %v500, %v335
      %v551 = vmul.f32 %v503, %v335
      %v552 = vmul.f32 %v506, %v335
      %v553 = vmul.f32 %v509, %v335
      %v554 = vmul.f32 %v512, %v335
      %v555 = vmul.f32 %v515, %v335
      %v556 = vmul.f32 %v518, %v335
      %v557 = vmul.f32 %v521, %v335
      %v558 = vmul.f32 %v524, %v335
      %v559 = vmul.f32 %v527, %v335
      %v560 = vadd.f32 %v528, 1e-05
      %v561 = vadd.f32 %v529, 1e-05
      %v562 = vadd.f32 %v530, 1e-05
      %v563 = vadd.f32 %v531, 1e-05
      %v564 = vadd.f32 %v532, 1e-05
      %v565 = vadd.f32 %v533, 1e-05
      %v566 = vadd.f32 %v534, 1e-05
      %v567 = vadd.f32 %v535, 1e-05
      %v568 = vadd.f32 %v536, 1e-05
      %v569 = vadd.f32 %v537, 1e-05
      %v570 = vadd.f32 %v538, 1e-05
      %v571 = vadd.f32 %v539, 1e-05
      %v572 = vadd.f32 %v540, 1e-05
      %v573 = vadd.f32 %v541, 1e-05
      %v574 = vadd.f32 %v542, 1e-05
      %v575 = vadd.f32 %v543, 1e-05
      %v576 = vadd.f32 %v544, 1e-05
      %v577 = vadd.f32 %v545, 1e-05
      %v578 = vadd.f32 %v546, 1e-05
      %v579 = vadd.f32 %v547, 1e-05
      %v580 = vadd.f32 %v548, 1e-05
      %v581 = vadd.f32 %v549, 1e-05
      %v582 = vadd.f32 %v550, 1e-05
      %v583 = vadd.f32 %v551, 1e-05
      %v584 = vadd.f32 %v552, 1e-05
      %v585 = vadd.f32 %v553, 1e-05
      %v586 = vadd.f32 %v554, 1e-05
      %v587 = vadd.f32 %v555, 1e-05
      %v588 = vadd.f32 %v556, 1e-05
      %v589 = vadd.f32 %v557, 1e-05
      %v590 = vadd.f32 %v558, 1e-05
      %v591 = vadd.f32 %v559, 1e-05
      %v592 = vrsqrt.pop %v560
      %v593 = vrsqrt.pop %v561
      %v594 = vrsqrt.pop %v562
      %v595 = vrsqrt.pop %v563
      %v596 = vrsqrt.pop %v564
      %v597 = vrsqrt.pop %v565
      %v598 = vrsqrt.pop %v566
      %v599 = vrsqrt.pop %v567
      %v600 = vrsqrt.pop %v568
      %v601 = vrsqrt.pop %v569
      %v602 = vrsqrt.pop %v570
      %v603 = vrsqrt.pop %v571
      %v604 = vrsqrt.pop %v572
      %v605 = vrsqrt.pop %v573
      %v606 = vrsqrt.pop %v574
      %v607 = vrsqrt.pop %v575
      %v608 = vrsqrt.pop %v576
      %v609 = vrsqrt.pop %v577
      %v610 = vrsqrt.pop %v578
      %v611 = vrsqrt.pop %v579
      %v612 = vrsqrt.pop %v580
      %v613 = vrsqrt.pop %v581
      %v614 = vrsqrt.pop %v582
      %v615 = vrsqrt.pop %v583
      %v616 = vrsqrt.pop %v584
      %v617 = vrsqrt.pop %v585
      %v618 = vrsqrt.pop %v586
      %v619 = vrsqrt.pop %v587
      %v620 = vrsqrt.pop %v588
      %v621 = vrsqrt.pop %v589
      %v622 = vrsqrt.pop %v590
      %v623 = vrsqrt.pop %v591
      %v624 = vmul.f32 %v368, %v592
      %v625 = vmul.f32 %v369, %v593
      %v626 = vmul.f32 %v370, %v594
      %v627 = vmul.f32 %v371, %v595
      %v628 = vmul.f32 %v372, %v596
      %v629 = vmul.f32 %v373, %v597
      %v630 = vmul.f32 %v374, %v598
      %v631 = vmul.f32 %v375, %v599
      %v632 = vmul.f32 %v376, %v600
      %v633 = vmul.f32 %v377, %v601
      %v634 = vmul.f32 %v378, %v602
      %v635 = vmul.f32 %v379, %v603
      %v636 = vmul.f32 %v380, %v604
      %v637 = vmul.f32 %v381, %v605
      %v638 = vmul.f32 %v382, %v606
      %v639 = vmul.f32 %v383, %v607
      %v640 = vmul.f32 %v384, %v608
      %v641 = vmul.f32 %v385, %v609
      %v642 = vmul.f32 %v386, %v610
      %v643 = vmul.f32 %v387, %v611
      %v644 = vmul.f32 %v388, %v612
      %v645 = vmul.f32 %v389, %v613
      %v646 = vmul.f32 %v390, %v614
      %v647 = vmul.f32 %v391, %v615
      %v648 = vmul.f32 %v392, %v616
      %v649 = vmul.f32 %v393, %v617
      %v650 = vmul.f32 %v394, %v618
      %v651 = vmul.f32 %v395, %v619
      %v652 = vmul.f32 %v396, %v620
      %v653 = vmul.f32 %v397, %v621
      %v654 = vmul.f32 %v398, %v622
      %v655 = vmul.f32 %v399, %v623
      %v656 = vld [vmem:[%s1] sm:$0x1]
      %v658 = vlaneseq
      %v659 = vshrl.u32 %v658, 7
      %v660 = vsub.s32 0, %v659
      %v661 = vrot.slane %v656, %v660
      %v663 = vmul.f32 %v624, %v661
      %v664 = vmul.f32 %v625, %v661
      %v665 = vmul.f32 %v626, %v661
      %v666 = vmul.f32 %v627, %v661
      %v667 = vmul.f32 %v628, %v661
      %v668 = vmul.f32 %v629, %v661
      %v669 = vmul.f32 %v630, %v661
      %v670 = vmul.f32 %v631, %v661
      %v671 = vmul.f32 %v632, %v661
      %v672 = vmul.f32 %v633, %v661
      %v673 = vmul.f32 %v634, %v661
      %v674 = vmul.f32 %v635, %v661
      %v675 = vmul.f32 %v636, %v661
      %v676 = vmul.f32 %v637, %v661
      %v677 = vmul.f32 %v638, %v661
      %v678 = vmul.f32 %v639, %v661
      %v679 = vmul.f32 %v640, %v661
      %v680 = vmul.f32 %v641, %v661
      %v681 = vmul.f32 %v642, %v661
      %v682 = vmul.f32 %v643, %v661
      %v683 = vmul.f32 %v644, %v661
      %v684 = vmul.f32 %v645, %v661
      %v685 = vmul.f32 %v646, %v661
      %v686 = vmul.f32 %v647, %v661
      %v687 = vmul.f32 %v648, %v661
      %v688 = vmul.f32 %v649, %v661
      %v689 = vmul.f32 %v650, %v661
      %v690 = vmul.f32 %v651, %v661
      %v691 = vmul.f32 %v652, %v661
      %v692 = vmul.f32 %v653, %v661
      %v693 = vmul.f32 %v654, %v661
      %v694 = vmul.f32 %v655, %v661
      %v695 = vld [vmem:[%s2] sm:$0x1]
      %v697 = vlaneseq
      %v698 = vshrl.u32 %v697, 7
      %v699 = vsub.s32 0, %v698
      %v700 = vrot.slane %v695, %v699
      %v702 = vadd.f32 %v663, %v700
      %v703 = vadd.f32 %v664, %v700
      %v704 = vadd.f32 %v665, %v700
      %v705 = vadd.f32 %v666, %v700
      %v706 = vadd.f32 %v667, %v700
      %v707 = vadd.f32 %v668, %v700
      %v708 = vadd.f32 %v669, %v700
      %v709 = vadd.f32 %v670, %v700
      %v710 = vadd.f32 %v671, %v700
      %v711 = vadd.f32 %v672, %v700
      %v712 = vadd.f32 %v673, %v700
      %v713 = vadd.f32 %v674, %v700
      %v714 = vadd.f32 %v675, %v700
      %v715 = vadd.f32 %v676, %v700
      %v716 = vadd.f32 %v677, %v700
      %v717 = vadd.f32 %v678, %v700
      %v718 = vadd.f32 %v679, %v700
      %v719 = vadd.f32 %v680, %v700
      %v720 = vadd.f32 %v681, %v700
      %v721 = vadd.f32 %v682, %v700
      %v722 = vadd.f32 %v683, %v700
      %v723 = vadd.f32 %v684, %v700
      %v724 = vadd.f32 %v685, %v700
      %v725 = vadd.f32 %v686, %v700
      %v726 = vadd.f32 %v687, %v700
      %v727 = vadd.f32 %v688, %v700
      %v728 = vadd.f32 %v689, %v700
      %v729 = vadd.f32 %v690, %v700
      %v730 = vadd.f32 %v691, %v700
      %v731 = vadd.f32 %v692, %v700
      %v732 = vadd.f32 %v693, %v700
      %v733 = vadd.f32 %v694, %v700
      %v734 = vpack.c.bf16 %v703, %v702
      %v735 = vpack.c.bf16 %v705, %v704
      %v736 = vpack.c.bf16 %v707, %v706
      %v737 = vpack.c.bf16 %v709, %v708
      %v738 = vpack.c.bf16 %v711, %v710
      %v739 = vpack.c.bf16 %v713, %v712
      %v740 = vpack.c.bf16 %v715, %v714
      %v741 = vpack.c.bf16 %v717, %v716
      %v742 = vpack.c.bf16 %v719, %v718
      %v743 = vpack.c.bf16 %v721, %v720
      %v744 = vpack.c.bf16 %v723, %v722
      %v745 = vpack.c.bf16 %v725, %v724
      %v746 = vpack.c.bf16 %v727, %v726
      %v747 = vpack.c.bf16 %v729, %v728
      %v748 = vpack.c.bf16 %v731, %v730
      %v749 = vpack.c.bf16 %v733, %v732
      %v766 = vunpack.c.l.b16 %v734
      %v767 = vunpack.c.h.b16 %v734
      %v768 = vunpack.c.l.b16 %v735
      %v769 = vunpack.c.h.b16 %v735
      %v770 = vunpack.c.l.b16 %v736
      %v771 = vunpack.c.h.b16 %v736
      %v772 = vunpack.c.l.b16 %v737
      %v773 = vunpack.c.h.b16 %v737
      %v774 = vunpack.c.l.b16 %v738
      %v775 = vunpack.c.h.b16 %v738
      %v776 = vunpack.c.l.b16 %v739
      %v777 = vunpack.c.h.b16 %v739
      %v778 = vunpack.c.l.b16 %v740
      %v779 = vunpack.c.h.b16 %v740
      %v780 = vunpack.c.l.b16 %v741
      %v781 = vunpack.c.h.b16 %v741
      %v782 = vunpack.c.l.b16 %v742
      %v783 = vunpack.c.h.b16 %v742
      %v784 = vunpack.c.l.b16 %v743
      %v785 = vunpack.c.h.b16 %v743
      %v786 = vunpack.c.l.b16 %v744
      %v787 = vunpack.c.h.b16 %v744
      %v788 = vunpack.c.l.b16 %v745
      %v789 = vunpack.c.h.b16 %v745
      %v790 = vunpack.c.l.b16 %v746
      %v791 = vunpack.c.h.b16 %v746
      %v792 = vunpack.c.l.b16 %v747
      %v793 = vunpack.c.h.b16 %v747
      %v794 = vunpack.c.l.b16 %v748
      %v795 = vunpack.c.h.b16 %v748
      %v796 = vunpack.c.l.b16 %v749
      %v797 = vunpack.c.h.b16 %v749
      %v798 = vpack.c.b16 %v766, %v766
      %v799 = vpack.c.b16 %v767, %v767
      %v800 = vpack.c.b16 %v768, %v768
      %v801 = vpack.c.b16 %v769, %v769
      %v802 = vpack.c.b16 %v770, %v770
      %v803 = vpack.c.b16 %v771, %v771
      %v804 = vpack.c.b16 %v772, %v772
      %v805 = vpack.c.b16 %v773, %v773
      %v806 = vpack.c.b16 %v774, %v774
      %v807 = vpack.c.b16 %v775, %v775
      %v808 = vpack.c.b16 %v776, %v776
      %v809 = vpack.c.b16 %v777, %v777
      %v810 = vpack.c.b16 %v778, %v778
      %v811 = vpack.c.b16 %v779, %v779
      %v812 = vpack.c.b16 %v780, %v780
      %v813 = vpack.c.b16 %v781, %v781
      %v814 = vpack.c.b16 %v782, %v782
      %v815 = vpack.c.b16 %v783, %v783
      %v816 = vpack.c.b16 %v784, %v784
      %v817 = vpack.c.b16 %v785, %v785
      %v818 = vpack.c.b16 %v786, %v786
      %v819 = vpack.c.b16 %v787, %v787
      %v820 = vpack.c.b16 %v788, %v788
      %v821 = vpack.c.b16 %v789, %v789
      %v822 = vpack.c.b16 %v790, %v790
      %v823 = vpack.c.b16 %v791, %v791
      %v824 = vpack.c.b16 %v792, %v792
      %v825 = vpack.c.b16 %v793, %v793
      %v826 = vpack.c.b16 %v794, %v794
      %v827 = vpack.c.b16 %v795, %v795
      %v828 = vpack.c.b16 %v796, %v796
      %v829 = vpack.c.b16 %v797, %v797
      %vm862 = vcmask 519168
      %863 = vst.msk [vmem:[%s172] sm:$0xf] %vm862, %v798
      %864 = vst.msk [vmem:[%s172 + $0x4] sm:$0xf] %vm862, %v799
      %865 = vst.msk [vmem:[%s172 + $0x8] sm:$0xf] %vm862, %v800
      %866 = vst.msk [vmem:[%s172 + $0xc] sm:$0xf] %vm862, %v801
      %867 = vst.msk [vmem:[%s172 + $0x10] sm:$0xf] %vm862, %v802
      %868 = vst.msk [vmem:[%s172 + $0x14] sm:$0xf] %vm862, %v803
      %869 = vst.msk [vmem:[%s172 + $0x18] sm:$0xf] %vm862, %v804
      %870 = vst.msk [vmem:[%s172 + $0x1c] sm:$0xf] %vm862, %v805
      %871 = vst.msk [vmem:[%s172 + $0x20] sm:$0xf] %vm862, %v806
      %872 = vst.msk [vmem:[%s172 + $0x24] sm:$0xf] %vm862, %v807
      %873 = vst.msk [vmem:[%s172 + $0x28] sm:$0xf] %vm862, %v808
      %874 = vst.msk [vmem:[%s172 + $0x2c] sm:$0xf] %vm862, %v809
      %875 = vst.msk [vmem:[%s172 + $0x30] sm:$0xf] %vm862, %v810
      %876 = vst.msk [vmem:[%s172 + $0x34] sm:$0xf] %vm862, %v811
      %877 = vst.msk [vmem:[%s172 + $0x38] sm:$0xf] %vm862, %v812
      %878 = vst.msk [vmem:[%s172 + $0x3c] sm:$0xf] %vm862, %v813
      %879 = vst.msk [vmem:[%s172 + $0x40] sm:$0xf] %vm862, %v814
      %880 = vst.msk [vmem:[%s172 + $0x44] sm:$0xf] %vm862, %v815
      %881 = vst.msk [vmem:[%s172 + $0x48] sm:$0xf] %vm862, %v816
      %882 = vst.msk [vmem:[%s172 + $0x4c] sm:$0xf] %vm862, %v817
      %883 = vst.msk [vmem:[%s172 + $0x50] sm:$0xf] %vm862, %v818
      %884 = vst.msk [vmem:[%s172 + $0x54] sm:$0xf] %vm862, %v819
      %885 = vst.msk [vmem:[%s172 + $0x58] sm:$0xf] %vm862, %v820
      %886 = vst.msk [vmem:[%s172 + $0x5c] sm:$0xf] %vm862, %v821
      %887 = vst.msk [vmem:[%s172 + $0x60] sm:$0xf] %vm862, %v822
      %888 = vst.msk [vmem:[%s172 + $0x64] sm:$0xf] %vm862, %v823
      %889 = vst.msk [vmem:[%s172 + $0x68] sm:$0xf] %vm862, %v824
      %890 = vst.msk [vmem:[%s172 + $0x6c] sm:$0xf] %vm862, %v825
      %891 = vst.msk [vmem:[%s172 + $0x70] sm:$0xf] %vm862, %v826
      %892 = vst.msk [vmem:[%s172 + $0x74] sm:$0xf] %vm862, %v827
      %893 = vst.msk [vmem:[%s172 + $0x78] sm:$0xf] %vm862, %v828
      %894 = vst.msk [vmem:[%s172 + $0x7c] sm:$0xf] %vm862, %v829
      %s895 = smul.u32 32, %s14
      %p896 = scmp.lt.s32.totalorder %s895, 63
      %s897 = scalar_select %p896, %s895, 63
      %s898 = smul.addr %s897, 4
      %s899 = scalar_lea.vmem %s3, %s898
      // Predicated region
      $region33: #{patch_embed.3} parent=31 // pred_check
        %p900 = pneg %p100
      $region34: #{patch_embed.3} parent=31 // pred_check_branch
        %902 = sbr.rel (%p900) target = $region36
      $region35: #{patch_embed.3} parent=31 // pred_region
        %s903 = smul.u32 32, %s14
      $region36: #{patch_embed.3} parent=31 // pred_fallthru
        _
    $region32: #{patch_embed.3} parent=5 // pred_fallthru
      _
    %p904 = scmp.le.s32.totalorder 2, %s9
    // Predicated region
    $region37: #{patch_embed.3} parent=5 // pred_check
      %p905 = pneg %p904
    $region38: #{patch_embed.3} parent=5 // pred_check_branch
      %907 = sbr.rel (%p905) target = $region40
    $region39: #{patch_embed.3} parent=5 // pred_region
      %s908 = ssub.s32 %s9, 2
      // Predicated region
      $region41: #{patch_embed.3} parent=39 // pred_check
        %p909 = pneg %p106
      $region42: #{patch_embed.3} parent=39 // pred_check_branch
        %911 = sbr.rel (%p909) target = $region44
      $region43: #{patch_embed.3} parent=39 // pred_region
        %s912 = smul.u32 32, %s15
        %p913 = scmp.lt.s32.totalorder %s912, 63
        %s914 = scalar_select %p913, %s912, 63
        %s915 = smul.addr %s914, 4
        %s916 = scalar_lea.vmem %s3, %s915
      $region44: #{patch_embed.3} parent=39 // pred_fallthru
        _
    $region40: #{patch_embed.3} parent=5 // pred_fallthru
      _
  $region6: #{patch_embed.3} parent=0 // loop_footer
    %s13 = sadd.s32 1, %s9
  $region7: #{patch_embed.3} parent=0 // loop_footer_branch
    %8 = sbr.rel target = $region3
  $region8: #{patch_embed.3} parent=0 // loop_exit
    _

// kernel: patch_embed.2
$region0: #{patch_embed.2}
  #allocation0 [shape = 'u32[]', space=smem, size = 0x4, offset = 0x4, fixed_abs, tag = 'smem constant byte address 0x4 - core index']
  #allocation1 [shape = 'u32[144,128]{1,0:T(1,128)}', space=vmem, size = 0x12000, scoped, tag = 'internal scratch']
  %s0 = inlined_call_operand.vmem [shape: bf16[512,147], index: 0, kind: input, shape index: {}]
  %s1 = inlined_call_operand.vmem [shape: bf16[147,64], index: 1, kind: input, shape index: {}]
  %s2 = inlined_call_operand.vmem [shape: f32[1,64], index: 2, kind: input, shape index: {}]
  %s3 = inlined_call_operand.vmem [shape: bf16[512,64], index: 3, kind: output, shape index: {}]
  %s4 = sld [smem:[#allocation0]]
  $region45: #{patch_embed.2} parent=0
    _
  %s6 = ssub.s32 1, %s4
  %s7 = scalar_select 0, %s6, %s4
  loop: start=0, step=1, limit=4
  $region2: #{patch_embed.2} parent=0 // loop_pre_header
    _
  $region3: #{patch_embed.2} parent=0 // loop_header
    %s9 = sphi 0, %s13
    %p10 = scmp.ge.s32.totalorder %s9, 4
    %s16 = sphi 0, %s28
    %s17 = sphi 0, %s24
    %s18 = sphi 0, %s16
    %s19 = sphi 0, %s17
    %s20 = sphi 0, %s18
    %s21 = sphi 0, %s19
    %s31 = sphi 0, %s33
    %s34 = sphi 0, %s31
    %s35 = sphi 0, %s34
    %s51 = sphi 0, %s35
    %s57 = sphi 0, %s59
    %s60 = sphi 0, %s57
    %s61 = sphi 0, %s60
    %s77 = sphi 0, %s61
    %s83 = sphi 0, %s85
    %s86 = sphi 0, %s83
    %s87 = sphi 0, %s86
    %s103 = sphi 0, %s87
    %s111 = sphi 0, %s113
    %s114 = sphi 0, %s111
    %s115 = sphi 0, %s114
    %s131 = sphi 0, %s115
  $region4: #{patch_embed.2} parent=0 // loop_header_branch
    %12 = sbr.rel (%p10) target = $region8
  $region5: #{patch_embed.2} parent=0 // loop_body
    %s14 = ssub.s32 %s9, 1
    %s15 = ssub.s32 %s9, 2
    %s22 = sadd.s32 1, %s17
    %p23 = scmp.ge.s32.totalorder %s22, 1
    %s24 = scalar_select %p23, 0, %s22
    %s25 = sadd.s32 1, %s16
    %s26 = scalar_select %p23, %s25, %s16
    %p27 = scmp.ge.s32.totalorder %s26, 2
    %s28 = scalar_select %p27, 0, %s26
    %s29 = ssub.s32 %s16, %s28
    %p30 = scmp.eq.s32.totalorder %s29, 0
    %s32 = sadd.s32 %s31, 1
    %s33 = scalar_select %p30, %s31, %s32
    %p36 = pneg %p30
    %p37 = scmp.eq.s32.totalorder %s9, 1
    %p38 = por %p36, %p37
    %p39 = scmp.ne.s32.totalorder %s31, %s34
    %p40 = scmp.eq.s32.totalorder %s9, 0
    %p41 = por %p39, %p40
    %p42 = scmp.ne.s32.totalorder %s31, %s34
    %p43 = scmp.eq.s32.totalorder %s14, 1
    %p44 = por %p42, %p43
    %p45 = scmp.ne.s32.totalorder %s34, %s35
    %p46 = scmp.eq.s32.totalorder %s14, 0
    %p47 = por %p45, %p46
    %p48 = scmp.ne.s32.totalorder %s34, %s35
    %p49 = scmp.eq.s32.totalorder %s15, 1
    %p50 = por %p48, %p49
    %p52 = scmp.ne.s32.totalorder %s35, %s51
    %p53 = scmp.eq.s32.totalorder %s15, 0
    %p54 = por %p52, %p53
    %s55 = ssub.s32 %s17, %s24
    %p56 = scmp.eq.s32.totalorder %s55, 0
    %s58 = sadd.s32 %s57, 1
    %s59 = scalar_select %p56, %s57, %s58
    %p62 = pneg %p56
    %p63 = scmp.eq.s32.totalorder %s9, 1
    %p64 = por %p62, %p63
    %p65 = scmp.ne.s32.totalorder %s57, %s60
    %p66 = scmp.eq.s32.totalorder %s9, 0
    %p67 = por %p65, %p66
    %p68 = scmp.ne.s32.totalorder %s57, %s60
    %p69 = scmp.eq.s32.totalorder %s14, 1
    %p70 = por %p68, %p69
    %p71 = scmp.ne.s32.totalorder %s60, %s61
    %p72 = scmp.eq.s32.totalorder %s14, 0
    %p73 = por %p71, %p72
    %p74 = scmp.ne.s32.totalorder %s60, %s61
    %p75 = scmp.eq.s32.totalorder %s15, 1
    %p76 = por %p74, %p75
    %p78 = scmp.ne.s32.totalorder %s61, %s77
    %p79 = scmp.eq.s32.totalorder %s15, 0
    %p80 = por %p78, %p79
    %s81 = ssub.s32 %s17, %s24
    %p82 = scmp.eq.s32.totalorder %s81, 0
    %s84 = sadd.s32 %s83, 1
    %s85 = scalar_select %p82, %s83, %s84
    %p88 = pneg %p82
    %p89 = scmp.eq.s32.totalorder %s9, 1
    %p90 = por %p88, %p89
    %p91 = scmp.ne.s32.totalorder %s83, %s86
    %p92 = scmp.eq.s32.totalorder %s9, 0
    %p93 = por %p91, %p92
    %p94 = scmp.ne.s32.totalorder %s83, %s86
    %p95 = scmp.eq.s32.totalorder %s14, 1
    %p96 = por %p94, %p95
    %p97 = scmp.ne.s32.totalorder %s86, %s87
    %p98 = scmp.eq.s32.totalorder %s14, 0
    %p99 = por %p97, %p98
    %p100 = scmp.ne.s32.totalorder %s86, %s87
    %p101 = scmp.eq.s32.totalorder %s15, 1
    %p102 = por %p100, %p101
    %p104 = scmp.ne.s32.totalorder %s87, %s103
    %p105 = scmp.eq.s32.totalorder %s15, 0
    %p106 = por %p104, %p105
    %s107 = ssub.s32 %s16, %s28
    %s108 = ssub.s32 %s17, %s24
    %s109 = sor.u32 %s107, %s108
    %p110 = scmp.eq.s32.totalorder %s109, 0
    %s112 = sadd.s32 %s111, 1
    %s113 = scalar_select %p110, %s111, %s112
    %p116 = pneg %p110
    %p117 = scmp.eq.s32.totalorder %s9, 1
    %p118 = por %p116, %p117
    %p119 = scmp.ne.s32.totalorder %s111, %s114
    %p120 = scmp.eq.s32.totalorder %s9, 0
    %p121 = por %p119, %p120
    %p122 = scmp.ne.s32.totalorder %s111, %s114
    %p123 = scmp.eq.s32.totalorder %s14, 1
    %p124 = por %p122, %p123
    %p125 = scmp.ne.s32.totalorder %s114, %s115
    %p126 = scmp.eq.s32.totalorder %s14, 0
    %p127 = por %p125, %p126
    %p128 = scmp.ne.s32.totalorder %s114, %s115
    %p129 = scmp.eq.s32.totalorder %s15, 1
    %p130 = por %p128, %p129
    %p132 = scmp.ne.s32.totalorder %s115, %s131
    %p133 = scmp.eq.s32.totalorder %s15, 0
    %p134 = por %p132, %p133
    %p135 = scmp.le.s32.totalorder 1, %s9
    %p136 = scmp.lt.s32.totalorder %s9, 3
    %p137 = pnand %p135, %p136
    %p138 = pneg %p137
    // Predicated region
    $region9: #{patch_embed.2} parent=5 // pred_check
      _
    $region10: #{patch_embed.2} parent=5 // pred_check_branch
      %140 = sbr.rel (%p137) target = $region12
    $region11: #{patch_embed.2} parent=5 // pred_region
      %s141 = ssub.s32 %s9, 1
      // Predicated region
      $region13: #{patch_embed.2} parent=11 // pred_check
        %p142 = pneg %p73
      $region14: #{patch_embed.2} parent=11 // pred_check_branch
        %144 = sbr.rel (%p142) target = $region16
      $region15: #{patch_embed.2} parent=11 // pred_region
        %p145 = scmp.lt.s32.totalorder %s19, 0
        %s146 = scalar_select %p145, %s19, 0
        %s147 = smul.addr %s146, 4
        %s148 = scalar_lea.vmem %s1, %s147
      $region16: #{patch_embed.2} parent=11 // pred_fallthru
        _
      // Predicated region
      $region17: #{patch_embed.2} parent=11 // pred_check
        %p149 = pneg %p99
      $region18: #{patch_embed.2} parent=11 // pred_check_branch
        %151 = sbr.rel (%p149) target = $region20
      $region19: #{patch_embed.2} parent=11 // pred_region
        %p152 = scmp.lt.s32.totalorder %s19, 0
        %s153 = scalar_select %p152, %s19, 0
        %s154 = scalar_lea.vmem %s2, %s153
      $region20: #{patch_embed.2} parent=11 // pred_fallthru
        _
    $region12: #{patch_embed.2} parent=5 // pred_fallthru
      _
    %p155 = scmp.lt.s32.totalorder %s9, 2
    // Predicated region
    $region21: #{patch_embed.2} parent=5 // pred_check
      %p156 = pneg %p155
    $region22: #{patch_embed.2} parent=5 // pred_check_branch
      %158 = sbr.rel (%p156) target = $region24
    $region23: #{patch_embed.2} parent=5 // pred_region
      // Predicated region
      $region25: #{patch_embed.2} parent=23 // pred_check
        %p159 = pneg %p41
      $region26: #{patch_embed.2} parent=23 // pred_check_branch
        %161 = sbr.rel (%p159) target = $region28
      $region27: #{patch_embed.2} parent=23 // pred_region
        %s162 = smul.u32 32, %s16
        %p163 = scmp.lt.s32.totalorder %s162, 63
        %s164 = scalar_select %p163, %s162, 63
        %s165 = smul.addr %s164, 2
        %s166 = smul.addr %s165, 4
        %s167 = scalar_lea.vmem %s0, %s166
        %s168 = smul.u32 32, %s16
      $region28: #{patch_embed.2} parent=23 // pred_fallthru
        _
    $region24: #{patch_embed.2} parent=5 // pred_fallthru
      _
    %p169 = scmp.le.s32.totalorder 1, %s9
    %p170 = scmp.lt.s32.totalorder %s9, 3
    %p171 = pnand %p169, %p170
    %p172 = pneg %p171
    // Predicated region
    $region29: #{patch_embed.2} parent=5 // pred_check
      _
    $region30: #{patch_embed.2} parent=5 // pred_check_branch
      %174 = sbr.rel (%p171) target = $region32
    $region31: #{patch_embed.2} parent=5 // pred_region
      %s175 = ssub.s32 %s9, 1
      %s176 = smul.u32 32, %s18
      %p177 = scmp.lt.s32.totalorder %s176, 63
      %s178 = scalar_select %p177, %s176, 63
      %s179 = smul.addr %s178, 2
      %s180 = smul.addr %s179, 4
      %s181 = scalar_lea.vmem %s0, %s180
      %p182 = pneg %p47
      %p183 = pneg %p44
      %p184 = scmp.lt.s32.totalorder %s19, 0
      %s185 = scalar_select %p184, %s19, 0
      %s186 = smul.addr %s185, 4
      %s187 = scalar_lea.vmem %s1, %s186
      %p188 = pneg %p73
      %p189 = pneg %p70
      %p190 = scmp.lt.s32.totalorder %s19, 0
      %s191 = scalar_select %p190, %s19, 0
      %s192 = scalar_lea.vmem %s2, %s191
      %p193 = pneg %p99
      %p194 = pneg %p96
      %p195 = pneg %p127
      %p196 = pneg %p124
      %s197 = smul.u32 32, %s18
      %p198 = scmp.lt.s32.totalorder %s197, 63
      %s199 = scalar_select %p198, %s197, 63
      %p200 = scmp.lt.s32.totalorder %s19, 0
      %s201 = scalar_select %p200, %s19, 0
      %s202 = sadd.s32 %s201, %s199
      %s203 = smul.addr %s202, 4
      %s204 = scalar_lea.vmem %s3, %s203
      %s205 = smul.u32 32, %s18
      %p206 = scmp.lt.s32.totalorder %s205, 63
      %s207 = scalar_select %p206, %s205, 63
      %s208 = smul.addr %s207, 2
      %s209 = smul.addr %s208, 4
      %s210 = scalar_lea.vmem %s0, %s209
      %s211 = smul.u32 32, %s18
      %p212 = scmp.lt.s32.totalorder %s19, 0
      %s213 = scalar_select %p212, %s19, 0
      %s214 = smul.addr %s213, 4
      %s215 = scalar_lea.vmem %s1, %s214
      %p216 = scmp.lt.s32.totalorder %s19, 0
      %s217 = scalar_select %p216, %s19, 0
      %s218 = scalar_lea.vmem %s2, %s217
      %s219 = smul.u32 32, %s18
      %p220 = scmp.lt.s32.totalorder %s219, 63
      %s221 = scalar_select %p220, %s219, 63
      %p222 = scmp.lt.s32.totalorder %s19, 0
      %s223 = scalar_select %p222, %s19, 0
      %s224 = sadd.s32 %s223, %s221
      %s225 = smul.addr %s224, 4
      %s226 = scalar_lea.vmem %s3, %s225
      %s227 = smul.u32 32, %s18
      %v229 = vld [vmem:[%s210] sm:$0xff]
      %v230 = vld [vmem:[%s210 + $0x8] sm:$0xff]
      %v231 = vld [vmem:[%s210 + $0x10] sm:$0xff]
      %v232 = vld [vmem:[%s210 + $0x18] sm:$0xff]
      %v233 = vld [vmem:[%s210 + $0x20] sm:$0xff]
      %v234 = vld [vmem:[%s210 + $0x28] sm:$0xff]
      %v235 = vld [vmem:[%s210 + $0x30] sm:$0xff]
      %v236 = vld [vmem:[%s210 + $0x38] sm:$0xff]
      %v237 = vld [vmem:[%s210 + $0x40] sm:$0xff]
      %v238 = vld [vmem:[%s210 + $0x48] sm:$0xff]
      %v239 = vld [vmem:[%s210 + $0x50] sm:$0xff]
      %v240 = vld [vmem:[%s210 + $0x58] sm:$0xff]
      %v241 = vld [vmem:[%s210 + $0x60] sm:$0xff]
      %v242 = vld [vmem:[%s210 + $0x68] sm:$0xff]
      %v243 = vld [vmem:[%s210 + $0x70] sm:$0xff]
      %v244 = vld [vmem:[%s210 + $0x78] sm:$0xff]
      %v245 = vld [vmem:[%s210 + $0x80] sm:$0xff]
      %v246 = vld [vmem:[%s210 + $0x88] sm:$0xff]
      %v247 = vld [vmem:[%s210 + $0x90] sm:$0xff]
      %v248 = vld [vmem:[%s210 + $0x98] sm:$0xff]
      %v249 = vld [vmem:[%s210 + $0xa0] sm:$0xff]
      %v250 = vld [vmem:[%s210 + $0xa8] sm:$0xff]
      %v251 = vld [vmem:[%s210 + $0xb0] sm:$0xff]
      %v252 = vld [vmem:[%s210 + $0xb8] sm:$0xff]
      %v253 = vld [vmem:[%s210 + $0xc0] sm:$0xff]
      %v254 = vld [vmem:[%s210 + $0xc8] sm:$0xff]
      %v255 = vld [vmem:[%s210 + $0xd0] sm:$0xff]
      %v256 = vld [vmem:[%s210 + $0xd8] sm:$0xff]
      %v257 = vld [vmem:[%s210 + $0xe0] sm:$0xff]
      %v258 = vld [vmem:[%s210 + $0xe8] sm:$0xff]
      %v259 = vld [vmem:[%s210 + $0xf0] sm:$0xff]
      %v260 = vld [vmem:[%s210 + $0xf8] sm:$0xff]
      %v261 = vld [vmem:[%s215] sm:$0xf]
      %v262 = vld [vmem:[%s215 + $0x4] sm:$0xf]
      %v263 = vld [vmem:[%s215 + $0x8] sm:$0xf]
      %v264 = vld [vmem:[%s215 + $0xc] sm:$0xf]
      %v265 = vld [vmem:[%s215 + $0x10] sm:$0xf]
      %v266 = vld [vmem:[%s215 + $0x14] sm:$0xf]
      %v267 = vld [vmem:[%s215 + $0x18] sm:$0xf]
      %v268 = vld [vmem:[%s215 + $0x1c] sm:$0xf]
      %v269 = vld [vmem:[%s215 + $0x20] sm:$0xf]
      %v270 = vld [vmem:[%s215 + $0x24] sm:$0xf]
      %v271 = vld [vmem:[%s215 + $0x28] sm:$0xf]
      %v272 = vld [vmem:[%s215 + $0x2c] sm:$0xf]
      %v273 = vld [vmem:[%s215 + $0x30] sm:$0xf]
      %v274 = vld [vmem:[%s215 + $0x34] sm:$0xf]
      %v275 = vld [vmem:[%s215 + $0x38] sm:$0xf]
      %v276 = vld [vmem:[%s215 + $0x3c] sm:$0xf]
      %v277 = vld [vmem:[%s215 + $0x40] sm:$0xf]
      %v278 = vld [vmem:[%s215 + $0x44] sm:$0xf]
      %v279 = vld [vmem:[%s215 + $0x48] sm:$0x3]
      %v280 = vld [vmem:[%s218] sm:$0x1]
      %v282 = vlaneseq
      %v283 = vshrl.u32 %v282, 7
      %v284 = vsub.s32 0, %v283
      %v285 = vrot.slane %v280, %v284
      %v319 = vunpack.c.l.b16 %v229
      %v320 = vunpack.c.h.b16 %v229
      %v321 = vunpack.c.l.b16 %v230
      %v322 = vunpack.c.h.b16 %v230
      %v323 = vunpack.c.l.b16 %v231
      %v324 = vunpack.c.h.b16 %v231
      %v325 = vunpack.c.l.b16 %v232
      %v326 = vunpack.c.h.b16 %v232
      %v327 = vunpack.c.l.b16 %v233
      %v328 = vunpack.c.h.b16 %v233
      %v329 = vunpack.c.l.b16 %v234
      %v330 = vunpack.c.h.b16 %v234
      %v331 = vunpack.c.l.b16 %v235
      %v332 = vunpack.c.h.b16 %v235
      %v333 = vunpack.c.l.b16 %v236
      %v334 = vunpack.c.h.b16 %v236
      %v335 = vunpack.c.l.b16 %v237
      %v336 = vunpack.c.h.b16 %v237
      %v337 = vunpack.c.l.b16 %v238
      %v338 = vunpack.c.h.b16 %v238
      %v339 = vunpack.c.l.b16 %v239
      %v340 = vunpack.c.h.b16 %v239
      %v341 = vunpack.c.l.b16 %v240
      %v342 = vunpack.c.h.b16 %v240
      %v343 = vunpack.c.l.b16 %v241
      %v344 = vunpack.c.h.b16 %v241
      %v345 = vunpack.c.l.b16 %v242
      %v346 = vunpack.c.h.b16 %v242
      %v347 = vunpack.c.l.b16 %v243
      %v348 = vunpack.c.h.b16 %v243
      %v349 = vunpack.c.l.b16 %v244
      %v350 = vunpack.c.h.b16 %v244
      %v351 = vunpack.c.l.b16 %v245
      %v352 = vunpack.c.h.b16 %v245
      %v353 = vunpack.c.l.b16 %v246
      %v354 = vunpack.c.h.b16 %v246
      %v355 = vunpack.c.l.b16 %v247
      %v356 = vunpack.c.h.b16 %v247
      %v357 = vunpack.c.l.b16 %v248
      %v358 = vunpack.c.h.b16 %v248
      %v359 = vunpack.c.l.b16 %v249
      %v360 = vunpack.c.h.b16 %v249
      %v361 = vunpack.c.l.b16 %v250
      %v362 = vunpack.c.h.b16 %v250
      %v363 = vunpack.c.l.b16 %v251
      %v364 = vunpack.c.h.b16 %v251
      %v365 = vunpack.c.l.b16 %v252
      %v366 = vunpack.c.h.b16 %v252
      %v367 = vunpack.c.l.b16 %v253
      %v368 = vunpack.c.h.b16 %v253
      %v369 = vunpack.c.l.b16 %v254
      %v370 = vunpack.c.h.b16 %v254
      %v371 = vunpack.c.l.b16 %v255
      %v372 = vunpack.c.h.b16 %v255
      %v373 = vunpack.c.l.b16 %v256
      %v374 = vunpack.c.h.b16 %v256
      %v375 = vunpack.c.l.b16 %v257
      %v376 = vunpack.c.h.b16 %v257
      %v377 = vunpack.c.l.b16 %v258
      %v378 = vunpack.c.h.b16 %v258
      %v379 = vunpack.c.l.b16 %v259
      %v380 = vunpack.c.h.b16 %v259
      %v381 = vunpack.c.l.b16 %v260
      %v382 = vunpack.c.h.b16 %v260
      %v383 = vpack.c.b16 %v321, %v319
      %v384 = vpack.c.b16 %v322, %v320
      %v385 = vpack.c.b16 %v325, %v323
      %v386 = vpack.c.b16 %v326, %v324
      %v387 = vpack.c.b16 %v329, %v327
      %v388 = vpack.c.b16 %v330, %v328
      %v389 = vpack.c.b16 %v333, %v331
      %v390 = vpack.c.b16 %v334, %v332
      %v391 = vpack.c.b16 %v337, %v335
      %v392 = vpack.c.b16 %v338, %v336
      %v393 = vpack.c.b16 %v341, %v339
      %v394 = vpack.c.b16 %v342, %v340
      %v395 = vpack.c.b16 %v345, %v343
      %v396 = vpack.c.b16 %v346, %v344
      %v397 = vpack.c.b16 %v349, %v347
      %v398 = vpack.c.b16 %v350, %v348
      %v399 = vpack.c.b16 %v353, %v351
      %v400 = vpack.c.b16 %v354, %v352
      %v401 = vpack.c.b16 %v357, %v355
      %v402 = vpack.c.b16 %v358, %v356
      %v403 = vpack.c.b16 %v361, %v359
      %v404 = vpack.c.b16 %v362, %v360
      %v405 = vpack.c.b16 %v365, %v363
      %v406 = vpack.c.b16 %v366, %v364
      %v407 = vpack.c.b16 %v369, %v367
      %v408 = vpack.c.b16 %v370, %v368
      %v409 = vpack.c.b16 %v373, %v371
      %v410 = vpack.c.b16 %v374, %v372
      %v411 = vpack.c.b16 %v377, %v375
      %v412 = vpack.c.b16 %v378, %v376
      %v413 = vpack.c.b16 %v381, %v379
      %v414 = vpack.c.b16 %v382, %v380
      %v450 = vunpack.c.l.b16 %v261
      %v451 = vunpack.c.l.b16 %v262
      %v452 = vunpack.c.l.b16 %v263
      %v453 = vunpack.c.l.b16 %v264
      %v454 = vunpack.c.l.b16 %v265
      %v455 = vunpack.c.l.b16 %v266
      %v456 = vunpack.c.l.b16 %v267
      %v457 = vunpack.c.l.b16 %v268
      %v458 = vunpack.c.l.b16 %v269
      %v459 = vunpack.c.l.b16 %v270
      %v460 = vunpack.c.l.b16 %v271
      %v461 = vunpack.c.l.b16 %v272
      %v462 = vunpack.c.l.b16 %v273
      %v463 = vunpack.c.l.b16 %v274
      %v464 = vunpack.c.l.b16 %v275
      %v465 = vunpack.c.l.b16 %v276
      %v466 = vunpack.c.l.b16 %v277
      %v467 = vunpack.c.l.b16 %v278
      %v468 = vunpack.c.l.b16 %v279
      %v469 = vpack.c.b16 %v451, %v450
      %v470 = vpack.c.b16 %v453, %v452
      %v471 = vpack.c.b16 %v455, %v454
      %v472 = vpack.c.b16 %v457, %v456
      %v473 = vpack.c.b16 %v459, %v458
      %v474 = vpack.c.b16 %v461, %v460
      %v475 = vpack.c.b16 %v463, %v462
      %v476 = vpack.c.b16 %v465, %v464
      %v477 = vpack.c.b16 %v467, %v466
      %v478 = vpack.c.b16 %v468, %v468
      %vm488 = vcmask 154624
      %v490 = vsel %vm488, %v384, 0
      %v493 = vsel %vm488, %v386, 0
      %v496 = vsel %vm488, %v388, 0
      %v499 = vsel %vm488, %v390, 0
      %v502 = vsel %vm488, %v392, 0
      %v505 = vsel %vm488, %v394, 0
      %v508 = vsel %vm488, %v396, 0
      %v511 = vsel %vm488, %v398, 0
      %v514 = vsel %vm488, %v400, 0
      %v517 = vsel %vm488, %v402, 0
      %v520 = vsel %vm488, %v404, 0
      %v523 = vsel %vm488, %v406, 0
      %v526 = vsel %vm488, %v408, 0
      %v529 = vsel %vm488, %v410, 0
      %v532 = vsel %vm488, %v412, 0
      %v535 = vsel %vm488, %v414, 0
      %vm537 = vcmask 1040384
      %vm538 = vcmask 1041408
      %v539 = vsel %vm537, 4294967295, 65535
      %v540 = vsel %vm538, %v539, 0
      %v542 = vand.u32 %v478, %v540
      %544 = vmatprep.subr.bf16.mxu0 0
      %545 = vmatpush1.bf16.msra.mxu0 %v469
      %546 = vmatprep.subr.bf16.mxu0 0
      %547 = vmatpush1.bf16.msra.mxu0 %v470
      %548 = vmatprep.subr.bf16.mxu0 0
      %549 = vmatpush1.bf16.msra.mxu0 %v471
      %550 = vmatprep.subr.bf16.mxu0 0
      %551 = vmatpush1.bf16.msra.mxu0 %v472
      %552 = vmatprep.subr.bf16.mxu0 0
      %553 = vmatpush1.bf16.msra.mxu0 %v473
      %554 = vmatprep.subr.bf16.mxu0 0
      %555 = vmatpush1.bf16.msra.mxu0 %v474
      %556 = vmatprep.subr.bf16.mxu0 0
      %557 = vmatpush1.bf16.msra.mxu0 %v475
      %558 = vmatprep.subr.bf16.mxu0 0
      %559 = vmatpush1.bf16.msra.mxu0 %v476
      %560 = vmatprep.subr.bf16.mxu0 0
      %561 = vmatpush1.bf16.msra.mxu0 %v477
      %562 = vmatprep.subr.bf16.mxu0 0
      %563 = vmatpush1.bf16.msra.mxu0 %v542
      %564 = vmatprep.subr.bf16.mxu0 0
      %565 = vmatpush1.bf16.msra.mxu0 0
      %566 = vmatprep.subr.bf16.mxu0 0
      %567 = vmatpush1.bf16.msra.mxu0 0
      %568 = vmatprep.subr.bf16.mxu0 0
      %569 = vmatpush1.bf16.msra.mxu0 0
      %570 = vmatprep.subr.bf16.mxu0 0
      %571 = vmatpush1.bf16.msra.mxu0 0
      %572 = vmatprep.subr.bf16.mxu0 0
      %573 = vmatpush1.bf16.msra.mxu0 0
      %574 = vmatprep.subr.bf16.mxu0 0
      %575 = vmatpush1.bf16.msra.mxu0 0
      %576 = vmatprep.mubr.bf16.mxu0 %v490
      %577 = vmatmul.mubr.bf16.gmra.mrb[0].mxu0 %v383
      %v578 = vpop.f32.mrb[0].mxu0
      %v579 = vadd.f32 %v285, %v578
      %v580 = vpop.f32.mrb[0].mxu0
      %v581 = vpop.f32.mrb[0].mxu0
      %v582 = vadd.f32 %v285, %v581
      %v583 = vpop.f32.mrb[0].mxu0
      %584 = vmatprep.mubr.bf16.mxu0 %v493
      %585 = vmatmul.mubr.bf16.gmra.mrb[0].mxu0 %v385
      %v586 = vpop.f32.mrb[0].mxu0
      %v587 = vadd.f32 %v285, %v586
      %v588 = vpop.f32.mrb[0].mxu0
      %v589 = vpop.f32.mrb[0].mxu0
      %v590 = vadd.f32 %v285, %v589
      %v591 = vpop.f32.mrb[0].mxu0
      %592 = vmatprep.mubr.bf16.mxu0 %v496
      %593 = vmatmul.mubr.bf16.gmra.mrb[0].mxu0 %v387
      %v594 = vpop.f32.mrb[0].mxu0
      %v595 = vadd.f32 %v285, %v594
      %v596 = vpop.f32.mrb[0].mxu0
      %v597 = vpop.f32.mrb[0].mxu0
      %v598 = vadd.f32 %v285, %v597
      %v599 = vpop.f32.mrb[0].mxu0
      %600 = vmatprep.mubr.bf16.mxu0 %v499
      %601 = vmatmul.mubr.bf16.gmra.mrb[0].mxu0 %v389
      %v602 = vpop.f32.mrb[0].mxu0
      %v603 = vadd.f32 %v285, %v602
      %v604 = vpop.f32.mrb[0].mxu0
      %v605 = vpop.f32.mrb[0].mxu0
      %v606 = vadd.f32 %v285, %v605
      %v607 = vpop.f32.mrb[0].mxu0
      %608 = vmatprep.mubr.bf16.mxu0 %v502
      %609 = vmatmul.mubr.bf16.gmra.mrb[0].mxu0 %v391
      %v610 = vpop.f32.mrb[0].mxu0
      %v611 = vadd.f32 %v285, %v610
      %v612 = vpop.f32.mrb[0].mxu0
      %v613 = vpop.f32.mrb[0].mxu0
      %v614 = vadd.f32 %v285, %v613
      %v615 = vpop.f32.mrb[0].mxu0
      %616 = vmatprep.mubr.bf16.mxu0 %v505
      %617 = vmatmul.mubr.bf16.gmra.mrb[0].mxu0 %v393
      %v618 = vpop.f32.mrb[0].mxu0
      %v619 = vadd.f32 %v285, %v618
      %v620 = vpop.f32.mrb[0].mxu0
      %v621 = vpop.f32.mrb[0].mxu0
      %v622 = vadd.f32 %v285, %v621
      %v623 = vpop.f32.mrb[0].mxu0
      %624 = vmatprep.mubr.bf16.mxu0 %v508
      %625 = vmatmul.mubr.bf16.gmra.mrb[0].mxu0 %v395
      %v626 = vpop.f32.mrb[0].mxu0
      %v627 = vadd.f32 %v285, %v626
      %v628 = vpop.f32.mrb[0].mxu0
      %v629 = vpop.f32.mrb[0].mxu0
      %v630 = vadd.f32 %v285, %v629
      %v631 = vpop.f32.mrb[0].mxu0
      %632 = vmatprep.mubr.bf16.mxu0 %v511
      %633 = vmatmul.mubr.bf16.gmra.mrb[0].mxu0 %v397
      %v634 = vpop.f32.mrb[0].mxu0
      %v635 = vadd.f32 %v285, %v634
      %v636 = vpop.f32.mrb[0].mxu0
      %v637 = vpop.f32.mrb[0].mxu0
      %v638 = vadd.f32 %v285, %v637
      %v639 = vpop.f32.mrb[0].mxu0
      %640 = vmatprep.mubr.bf16.mxu0 %v514
      %641 = vmatmul.mubr.bf16.gmra.mrb[0].mxu0 %v399
      %v642 = vpop.f32.mrb[0].mxu0
      %v643 = vadd.f32 %v285, %v642
      %v644 = vpop.f32.mrb[0].mxu0
      %v645 = vpop.f32.mrb[0].mxu0
      %v646 = vadd.f32 %v285, %v645
      %v647 = vpop.f32.mrb[0].mxu0
      %648 = vmatprep.mubr.bf16.mxu0 %v517
      %649 = vmatmul.mubr.bf16.gmra.mrb[0].mxu0 %v401
      %v650 = vpop.f32.mrb[0].mxu0
      %v651 = vadd.f32 %v285, %v650
      %v652 = vpop.f32.mrb[0].mxu0
      %v653 = vpop.f32.mrb[0].mxu0
      %v654 = vadd.f32 %v285, %v653
      %v655 = vpop.f32.mrb[0].mxu0
      %656 = vmatprep.mubr.bf16.mxu0 %v520
      %657 = vmatmul.mubr.bf16.gmra.mrb[0].mxu0 %v403
      %v658 = vpop.f32.mrb[0].mxu0
      %v659 = vadd.f32 %v285, %v658
      %v660 = vpop.f32.mrb[0].mxu0
      %v661 = vpop.f32.mrb[0].mxu0
      %v662 = vadd.f32 %v285, %v661
      %v663 = vpop.f32.mrb[0].mxu0
      %664 = vmatprep.mubr.bf16.mxu0 %v523
      %665 = vmatmul.mubr.bf16.gmra.mrb[0].mxu0 %v405
      %v666 = vpop.f32.mrb[0].mxu0
      %v667 = vadd.f32 %v285, %v666
      %v668 = vpop.f32.mrb[0].mxu0
      %v669 = vpop.f32.mrb[0].mxu0
      %v670 = vadd.f32 %v285, %v669
      %v671 = vpop.f32.mrb[0].mxu0
      %672 = vmatprep.mubr.bf16.mxu0 %v526
      %673 = vmatmul.mubr.bf16.gmra.mrb[0].mxu0 %v407
      %v674 = vpop.f32.mrb[0].mxu0
      %v675 = vadd.f32 %v285, %v674
      %v676 = vpop.f32.mrb[0].mxu0
      %v677 = vpop.f32.mrb[0].mxu0
      %v678 = vadd.f32 %v285, %v677
      %v679 = vpop.f32.mrb[0].mxu0
      %680 = vmatprep.mubr.bf16.mxu0 %v529
      %681 = vmatmul.mubr.bf16.gmra.mrb[0].mxu0 %v409
      %v682 = vpop.f32.mrb[0].mxu0
      %v683 = vadd.f32 %v285, %v682
      %v684 = vpop.f32.mrb[0].mxu0
      %v685 = vpop.f32.mrb[0].mxu0
      %v686 = vadd.f32 %v285, %v685
      %v687 = vpop.f32.mrb[0].mxu0
      %688 = vmatprep.mubr.bf16.mxu0 %v532
      %689 = vmatmul.mubr.bf16.gmra.mrb[0].mxu0 %v411
      %v690 = vpop.f32.mrb[0].mxu0
      %v691 = vadd.f32 %v285, %v690
      %v692 = vpop.f32.mrb[0].mxu0
      %v693 = vpop.f32.mrb[0].mxu0
      %v694 = vadd.f32 %v285, %v693
      %v695 = vpop.f32.mrb[0].mxu0
      %696 = vmatprep.mubr.bf16.mxu0 %v535
      %697 = vmatmul.mubr.bf16.gmra.mrb[0].mxu0 %v413
      %v698 = vpop.f32.mrb[0].mxu0
      %v699 = vadd.f32 %v285, %v698
      %v700 = vpop.f32.mrb[0].mxu0
      %v701 = vpop.f32.mrb[0].mxu0
      %v702 = vadd.f32 %v285, %v701
      %v703 = vpop.f32.mrb[0].mxu0
      %704 = vdwg.mxu0
      %v705 = vpack.c.bf16 %v582, %v579
      %v706 = vpack.c.bf16 %v590, %v587
      %v707 = vpack.c.bf16 %v598, %v595
      %v708 = vpack.c.bf16 %v606, %v603
      %v709 = vpack.c.bf16 %v614, %v611
      %v710 = vpack.c.bf16 %v622, %v619
      %v711 = vpack.c.bf16 %v630, %v627
      %v712 = vpack.c.bf16 %v638, %v635
      %v713 = vpack.c.bf16 %v646, %v643
      %v714 = vpack.c.bf16 %v654, %v651
      %v715 = vpack.c.bf16 %v662, %v659
      %v716 = vpack.c.bf16 %v670, %v667
      %v717 = vpack.c.bf16 %v678, %v675
      %v718 = vpack.c.bf16 %v686, %v683
      %v719 = vpack.c.bf16 %v694, %v691
      %v720 = vpack.c.bf16 %v702, %v699
      %v737 = vunpack.c.l.b16 %v705
      %v738 = vunpack.c.h.b16 %v705
      %v739 = vunpack.c.l.b16 %v706
      %v740 = vunpack.c.h.b16 %v706
      %v741 = vunpack.c.l.b16 %v707
      %v742 = vunpack.c.h.b16 %v707
      %v743 = vunpack.c.l.b16 %v708
      %v744 = vunpack.c.h.b16 %v708
      %v745 = vunpack.c.l.b16 %v709
      %v746 = vunpack.c.h.b16 %v709
      %v747 = vunpack.c.l.b16 %v710
      %v748 = vunpack.c.h.b16 %v710
      %v749 = vunpack.c.l.b16 %v711
      %v750 = vunpack.c.h.b16 %v711
      %v751 = vunpack.c.l.b16 %v712
      %v752 = vunpack.c.h.b16 %v712
      %v753 = vunpack.c.l.b16 %v713
      %v754 = vunpack.c.h.b16 %v713
      %v755 = vunpack.c.l.b16 %v714
      %v756 = vunpack.c.h.b16 %v714
      %v757 = vunpack.c.l.b16 %v715
      %v758 = vunpack.c.h.b16 %v715
      %v759 = vunpack.c.l.b16 %v716
      %v760 = vunpack.c.h.b16 %v716
      %v761 = vunpack.c.l.b16 %v717
      %v762 = vunpack.c.h.b16 %v717
      %v763 = vunpack.c.l.b16 %v718
      %v764 = vunpack.c.h.b16 %v718
      %v765 = vunpack.c.l.b16 %v719
      %v766 = vunpack.c.h.b16 %v719
      %v767 = vunpack.c.l.b16 %v720
      %v768 = vunpack.c.h.b16 %v720
      %v769 = vpack.c.b16 %v737, %v737
      %v770 = vpack.c.b16 %v738, %v738
      %v771 = vpack.c.b16 %v739, %v739
      %v772 = vpack.c.b16 %v740, %v740
      %v773 = vpack.c.b16 %v741, %v741
      %v774 = vpack.c.b16 %v742, %v742
      %v775 = vpack.c.b16 %v743, %v743
      %v776 = vpack.c.b16 %v744, %v744
      %v777 = vpack.c.b16 %v745, %v745
      %v778 = vpack.c.b16 %v746, %v746
      %v779 = vpack.c.b16 %v747, %v747
      %v780 = vpack.c.b16 %v748, %v748
      %v781 = vpack.c.b16 %v749, %v749
      %v782 = vpack.c.b16 %v750, %v750
      %v783 = vpack.c.b16 %v751, %v751
      %v784 = vpack.c.b16 %v752, %v752
      %v785 = vpack.c.b16 %v753, %v753
      %v786 = vpack.c.b16 %v754, %v754
      %v787 = vpack.c.b16 %v755, %v755
      %v788 = vpack.c.b16 %v756, %v756
      %v789 = vpack.c.b16 %v757, %v757
      %v790 = vpack.c.b16 %v758, %v758
      %v791 = vpack.c.b16 %v759, %v759
      %v792 = vpack.c.b16 %v760, %v760
      %v793 = vpack.c.b16 %v761, %v761
      %v794 = vpack.c.b16 %v762, %v762
      %v795 = vpack.c.b16 %v763, %v763
      %v796 = vpack.c.b16 %v764, %v764
      %v797 = vpack.c.b16 %v765, %v765
      %v798 = vpack.c.b16 %v766, %v766
      %v799 = vpack.c.b16 %v767, %v767
      %v800 = vpack.c.b16 %v768, %v768
      %vm833 = vcmask 519168
      %834 = vst.msk [vmem:[%s226] sm:$0xf] %vm833, %v769
      %835 = vst.msk [vmem:[%s226 + $0x4] sm:$0xf] %vm833, %v770
      %836 = vst.msk [vmem:[%s226 + $0x8] sm:$0xf] %vm833, %v771
      %837 = vst.msk [vmem:[%s226 + $0xc] sm:$0xf] %vm833, %v772
      %838 = vst.msk [vmem:[%s226 + $0x10] sm:$0xf] %vm833, %v773
      %839 = vst.msk [vmem:[%s226 + $0x14] sm:$0xf] %vm833, %v774
      %840 = vst.msk [vmem:[%s226 + $0x18] sm:$0xf] %vm833, %v775
      %841 = vst.msk [vmem:[%s226 + $0x1c] sm:$0xf] %vm833, %v776
      %842 = vst.msk [vmem:[%s226 + $0x20] sm:$0xf] %vm833, %v777
      %843 = vst.msk [vmem:[%s226 + $0x24] sm:$0xf] %vm833, %v778
      %844 = vst.msk [vmem:[%s226 + $0x28] sm:$0xf] %vm833, %v779
      %845 = vst.msk [vmem:[%s226 + $0x2c] sm:$0xf] %vm833, %v780
      %846 = vst.msk [vmem:[%s226 + $0x30] sm:$0xf] %vm833, %v781
      %847 = vst.msk [vmem:[%s226 + $0x34] sm:$0xf] %vm833, %v782
      %848 = vst.msk [vmem:[%s226 + $0x38] sm:$0xf] %vm833, %v783
      %849 = vst.msk [vmem:[%s226 + $0x3c] sm:$0xf] %vm833, %v784
      %850 = vst.msk [vmem:[%s226 + $0x40] sm:$0xf] %vm833, %v785
      %851 = vst.msk [vmem:[%s226 + $0x44] sm:$0xf] %vm833, %v786
      %852 = vst.msk [vmem:[%s226 + $0x48] sm:$0xf] %vm833, %v787
      %853 = vst.msk [vmem:[%s226 + $0x4c] sm:$0xf] %vm833, %v788
      %854 = vst.msk [vmem:[%s226 + $0x50] sm:$0xf] %vm833, %v789
      %855 = vst.msk [vmem:[%s226 + $0x54] sm:$0xf] %vm833, %v790
      %856 = vst.msk [vmem:[%s226 + $0x58] sm:$0xf] %vm833, %v791
      %857 = vst.msk [vmem:[%s226 + $0x5c] sm:$0xf] %vm833, %v792
      %858 = vst.msk [vmem:[%s226 + $0x60] sm:$0xf] %vm833, %v793
      %859 = vst.msk [vmem:[%s226 + $0x64] sm:$0xf] %vm833, %v794
      %860 = vst.msk [vmem:[%s226 + $0x68] sm:$0xf] %vm833, %v795
      %861 = vst.msk [vmem:[%s226 + $0x6c] sm:$0xf] %vm833, %v796
      %862 = vst.msk [vmem:[%s226 + $0x70] sm:$0xf] %vm833, %v797
      %863 = vst.msk [vmem:[%s226 + $0x74] sm:$0xf] %vm833, %v798
      %864 = vst.msk [vmem:[%s226 + $0x78] sm:$0xf] %vm833, %v799
      %865 = vst.msk [vmem:[%s226 + $0x7c] sm:$0xf] %vm833, %v800
      %s866 = smul.u32 32, %s18
      %p867 = scmp.lt.s32.totalorder %s866, 63
      %s868 = scalar_select %p867, %s866, 63
      %p869 = scmp.lt.s32.totalorder %s19, 0
      %s870 = scalar_select %p869, %s19, 0
      %s871 = sadd.s32 %s870, %s868
      %s872 = smul.addr %s871, 4
      %s873 = scalar_lea.vmem %s3, %s872
      // Predicated region
      $region33: #{patch_embed.2} parent=31 // pred_check
        %p874 = pneg %p124
      $region34: #{patch_embed.2} parent=31 // pred_check_branch
        %876 = sbr.rel (%p874) target = $region36
      $region35: #{patch_embed.2} parent=31 // pred_region
        %s877 = smul.u32 32, %s18
      $region36: #{patch_embed.2} parent=31 // pred_fallthru
        _
    $region32: #{patch_embed.2} parent=5 // pred_fallthru
      _
    %p878 = scmp.le.s32.totalorder 2, %s9
    // Predicated region
    $region37: #{patch_embed.2} parent=5 // pred_check
      %p879 = pneg %p878
    $region38: #{patch_embed.2} parent=5 // pred_check_branch
      %881 = sbr.rel (%p879) target = $region40
    $region39: #{patch_embed.2} parent=5 // pred_region
      %s882 = ssub.s32 %s9, 2
      // Predicated region
      $region41: #{patch_embed.2} parent=39 // pred_check
        %p883 = pneg %p130
      $region42: #{patch_embed.2} parent=39 // pred_check_branch
        %885 = sbr.rel (%p883) target = $region44
      $region43: #{patch_embed.2} parent=39 // pred_region
        %s886 = smul.u32 32, %s20
        %p887 = scmp.lt.s32.totalorder %s886, 63
        %s888 = scalar_select %p887, %s886, 63
        %p889 = scmp.lt.s32.totalorder %s21, 0
        %s890 = scalar_select %p889, %s21, 0
        %s891 = sadd.s32 %s890, %s888
        %s892 = smul.addr %s891, 4
        %s893 = scalar_lea.vmem %s3, %s892
      $region44: #{patch_embed.2} parent=39 // pred_fallthru
        _
    $region40: #{patch_embed.2} parent=5 // pred_fallthru
      _
  $region6: #{patch_embed.2} parent=0 // loop_footer
    %s13 = sadd.s32 1, %s9
  $region7: #{patch_embed.2} parent=0 // loop_footer_branch
    %8 = sbr.rel target = $region3
  $region8: #{patch_embed.2} parent=0 // loop_exit
    _

</llo_original>
